<compile_context>
chip_gen: v7x
topology: tpu7x:2x2x1
jax: 0.10.0
libtpu: 0.0.40
codegen_flags: <defaults>
</compile_context>

<pallas_src>
import functools

import jax
import jax.numpy as jnp
import numpy as np
from jax.experimental import pallas as pl
from jax.experimental.pallas import tpu as pltpu


def _block_kernel(x_ref, wqkv_ref, wproj_ref, bproj_ref, mask_ref, elane_ref,
                  o_ref, *, heads, d, g, pp, n):
    """One grid step = pp packs of g lane-folded frames: linear attention +
    fused output projection + residual."""
    W = g * d                      # packed lane width (128 when d | 128)
    dh = d // heads
    scale = dh ** -0.5
    cdt = x_ref.dtype              # MXU operand dtype follows the input dtype

    x3 = x_ref[...]                                        # (pp, n, W)
    x2 = x3.reshape(pp * n, W)                             # token-major slab

    # to_qkv 1x1 conv: packed block-diagonal weight, f32 accumulation.
    qkv = jnp.dot(x2, wqkv_ref[...],
                  preferred_element_type=jnp.float32)      # (pp*n, 3W)
    # W is a multiple of 128 on the packed path -> tile-aligned slices.
    q = qkv[:, :W]
    k = qkv[:, W:2 * W]
    v = qkv[:, 2 * W:]

    mask = mask_ref[...]                                   # (W, W) block-diag per head group

    # ---- q softmax over each head's dh lanes (per token) ----
    # Exact per-head max: windowed running max of width dh via lane rolls,
    # then pick each group's end-lane value and broadcast it across the group
    # with one mask matmul (no relayout, no per-head Python loop).
    wm = q
    win = 1
    while win < dh:
        s = min(win, dh - win)
        wm = jnp.maximum(wm, pltpu.roll(wm, s, axis=1))
        win += s
    q_shift = jnp.dot(wm * elane_ref[...], mask,
                      preferred_element_type=jnp.float32)  # per-head max, broadcast
    q_e = jnp.exp(q - q_shift)
    q_den = jnp.dot(q_e, mask, preferred_element_type=jnp.float32)
    q_sm = (q_e / jnp.maximum(q_den, 1e-30)) * scale       # (pp*n, W)

    # ---- k softmax over the spatial axis, per frame/channel lane column ----
    k3 = k.reshape(pp, n, W)
    k_max = jnp.max(k3, axis=1, keepdims=True)
    k_e = jnp.exp(k3 - k_max)
    k_sm = (k_e / jnp.sum(k_e, axis=1, keepdims=True)).astype(cdt)   # (pp, n, W)

    v3 = v.reshape(pp, n, W).astype(cdt)
    q3 = q_sm.reshape(pp, n, W).astype(cdt)

    # Linear attention: full packed context per pack, masked to the
    # block-diagonal head/frame structure (cross-head/frame products are free
    # MXU padding), then one output matmul.
    context = jnp.einsum('pnd,pne->pde', k_sm, v3,
                         preferred_element_type=jnp.float32)         # (pp, W, W)
    context = (context * mask[None]).astype(cdt)
    attn = jnp.einsum('pnd,pde->pne', q3, context,
                      preferred_element_type=jnp.float32)            # (pp, n, W)

    # Fused (to_out 1x1 conv + fresh nn.Linear) projection + bias + residual.
    y = jnp.dot(attn.reshape(pp * n, W).astype(cdt), wproj_ref[...],
                preferred_element_type=jnp.float32) + bproj_ref[...]

    o_ref[...] = (y.reshape(pp, n, W) + x3).astype(o_ref.dtype)


def attention_inflation_block(x, w_qkv, w_out, b_out, w_lin, b_lin, *, heads):
    b, t, h, w_sp, d = x.shape
    n = h * w_sp
    F = b * t
    dh = d // heads
    assert heads * dh == d

    # --- frame packing factor g: fold g frames onto the lane axis so the
    # working lane width g*d reaches 128 (full vreg lane density). ---
    if d % 128 == 0:
        g = 1
    elif 128 % d == 0:
        g = 128 // d
    else:
        g = 1   # TODO(synk): pad d to a 128 multiple for the general case.
    if F % g != 0:
        g = 1
    W = g * d
    P = F // g

    xf = x.reshape(F, n, d)
    if g > 1:
        xp = xf.reshape(P, g, n, d).transpose(0, 2, 1, 3).reshape(P, n, W)
    else:
        xp = xf

    # --- one-time weight prep outside the kernel (packed / fused / pre-T) ---
    f32 = jnp.float32
    cdt = x.dtype
    wq_t = w_qkv[:d].T.astype(f32)
    wk_t = w_qkv[d:2 * d].T.astype(f32)
    wv_t = w_qkv[2 * d:].T.astype(f32)
    wproj_t = (w_lin.astype(f32) @ w_out.astype(f32)).T       # to_out ∘ nn.Linear fused (f32)
    bproj = (b_out.astype(f32) @ w_lin.T.astype(f32) + b_lin.astype(f32))  # (1, d)

    def bdiag(m):
        return jax.scipy.linalg.block_diag(*([m] * g)) if g > 1 else m

    wqkv_packed = jnp.concatenate(
        [bdiag(wq_t), bdiag(wk_t), bdiag(wv_t)], axis=1).astype(cdt)   # (W, 3W)
    wproj_packed = bdiag(wproj_t).astype(cdt)                          # (W, W)
    bproj_packed = jnp.tile(bproj, (1, g)).astype(f32)                 # (1, W)

    lane = jnp.arange(W)
    head_mask = (lane[:, None] // dh == lane[None, :] // dh).astype(f32)   # (W, W)
    end_lane = ((lane % dh) == dh - 1).astype(f32)[None, :]                # (1, W)

    # --- grid selection: 1 step on single-TC chips (v5e/v6e), >=2 even steps
    # on v7x so both TensorCores get work; VMEM guard shrinks the block. ---
    try:
        two_tc = "v7" in jax.devices()[0].device_kind.lower()
    except Exception:
        two_tc = False
    if two_tc and P >= 2:
        pp = max(1, P // 2)
    else:
        pp = P
    while P % pp:
        pp -= 1

    def _step_bytes(ppv):
        blk = ppv * n * W * x.dtype.itemsize
        tmp = ppv * n * W * 4 * 7 + ppv * W * W * 4   # qkv(3) + softmax temps + attn/y + context
        return 4 * blk + tmp                          # in+out, double buffered

    while pp > 1 and _step_bytes(pp) > 24 * 1024 * 1024:
        pp -= 1
        while P % pp:
            pp -= 1
    grid = (P // pp,)

    kernel = functools.partial(_block_kernel, heads=heads, d=d, g=g, pp=pp, n=n)

    out = pl.pallas_call(
        kernel,
        out_shape=jax.ShapeDtypeStruct((P, n, W), cdt),
        grid_spec=pltpu.PrefetchScalarGridSpec(
            num_scalar_prefetch=0,
            grid=grid,
            in_specs=[
                pl.BlockSpec((pp, n, W), lambda i: (i, 0, 0)),   # packed x slab
                pl.BlockSpec((W, 3 * W), lambda i: (0, 0)),      # packed to_qkv weight
                pl.BlockSpec((W, W), lambda i: (0, 0)),          # packed fused proj weight
                pl.BlockSpec((1, W), lambda i: (0, 0)),          # packed fused proj bias
                pl.BlockSpec((W, W), lambda i: (0, 0)),          # head/frame block-diag mask
                pl.BlockSpec((1, W), lambda i: (0, 0)),          # head-end lane selector
            ],
            out_specs=pl.BlockSpec((pp, n, W), lambda i: (i, 0, 0)),
        ),
        compiler_params=pltpu.CompilerParams(
            dimension_semantics=("parallel",)),
    )(xp, wqkv_packed, wproj_packed, bproj_packed, head_mask, end_lane)

    if g > 1:
        out = out.reshape(P, n, g, d).transpose(0, 2, 1, 3)
    return out.reshape(b, t, h, w_sp, d)


def reference(x, w_qkv, w_out, b_out, w_lin, b_lin, *, heads):
    """Pure-JAX reference mirroring the PyTorch forward pass."""
    b, t, h, w, d = x.shape
    dh = d // heads
    scale = dh ** -0.5
    xf = x.reshape(b * t, h * w, d)
    qkv = jnp.einsum('bnd,od->bno', xf, w_qkv)
    q, k, v = jnp.split(qkv, 3, axis=-1)

    def rh(a):
        return a.reshape(b * t, h * w, heads, dh).transpose(0, 2, 1, 3)

    q, k, v = rh(q), rh(k), rh(v)                          # (B, H, N, dh)
    q = jax.nn.softmax(q, axis=-1) * scale                 # softmax over dim_head
    k = jax.nn.softmax(k, axis=-2)                         # softmax over spatial
    context = jnp.einsum('bhnd,bhne->bhde', k, v)
    out = jnp.einsum('bhnd,bhde->bhne', q, context)
    out = out.transpose(0, 2, 1, 3).reshape(b * t, h * w, d)
    out = out @ w_out.T + b_out[0]
    out = out @ w_lin.T + b_lin[0]
    return out.reshape(b, t, h, w, d) + x


if __name__ == "__main__":
    # Small shapes consistent with the module's (b, t, h, w, d) input.
    b, t, h, w, d = 2, 4, 8, 8, 32
    heads = 4

    key = jax.random.PRNGKey(0)
    kx, k1, k2, k3, k4, k5 = jax.random.split(key, 6)

    x = jax.random.normal(kx, (b, t, h, w, d), dtype=jnp.float32)

    # Deterministic synthetic parameters (shapes from the module's __init__ /
    # SpatialLinearAttention: to_qkv Conv2d(d, 3d, 1, bias=False),
    # to_out Conv2d(d, d, 1), plus the fresh nn.Linear(d, d) built in forward()).
    w_qkv = jax.random.normal(k1, (3 * d, d), dtype=jnp.float32) * 0.05
    w_out = jax.random.normal(k2, (d, d), dtype=jnp.float32) * 0.05
    b_out = jax.random.normal(k3, (1, d), dtype=jnp.float32) * 0.05
    w_lin = jax.random.normal(k4, (d, d), dtype=jnp.float32) * 0.05
    b_lin = jax.random.normal(k5, (1, d), dtype=jnp.float32) * 0.05
    # TODO(synk): self.proj / self.norm / dropout exist in __init__ but are never
    # used in the reference forward(), so they are intentionally omitted.

    out = attention_inflation_block(x, w_qkv, w_out, b_out, w_lin, b_lin, heads=heads)
    out = jax.block_until_ready(out)

    ref = reference(x, w_qkv, w_out, b_out, w_lin, b_lin, heads=heads)
    np.testing.assert_allclose(np.asarray(out), np.asarray(ref), rtol=1e-4, atol=1e-4)
    assert out.shape == x.shape and out.dtype == x.dtype

    print("KERNEL_OK")
</pallas_src>

<mosaic_0001>
module attributes {stable_mosaic.version = 11 : i64} {
  func.func @_block_kernel(%arg0: i32, %arg1: memref<2x64x128xf32, #tpu.memory_space<vmem>>, %arg2: memref<128x384xf32, #tpu.memory_space<vmem>>, %arg3: memref<128x128xf32, #tpu.memory_space<vmem>>, %arg4: memref<1x128xf32, #tpu.memory_space<vmem>>, %arg5: memref<128x128xf32, #tpu.memory_space<vmem>>, %arg6: memref<1x128xf32, #tpu.memory_space<vmem>>, %arg7: memref<2x64x128xf32, #tpu.memory_space<vmem>>) attributes {dimension_semantics = [#tpu.dimension_semantics<parallel>], iteration_bounds = array<i64: 1>, scalar_prefetch = 0 : i64, scratch_operands = 0 : i64, tpu.core_type = #tpu.core_type<tc>, window_params = [{transform_indices = @transform_0, window_bounds = array<i64: 2, 64, 128>}, {pipeline_mode = #tpu.pipeline_mode<synchronous>, transform_indices = @transform_1, window_bounds = array<i64: 128, 384>}, {pipeline_mode = #tpu.pipeline_mode<synchronous>, transform_indices = @transform_2, window_bounds = array<i64: 128, 128>}, {pipeline_mode = #tpu.pipeline_mode<synchronous>, transform_indices = @transform_3, window_bounds = array<i64: 1, 128>}, {pipeline_mode = #tpu.pipeline_mode<synchronous>, transform_indices = @transform_4, window_bounds = array<i64: 128, 128>}, {pipeline_mode = #tpu.pipeline_mode<synchronous>, transform_indices = @transform_5, window_bounds = array<i64: 1, 128>}, {transform_indices = @transform_6, window_bounds = array<i64: 2, 64, 128>}]} {
    %c0 = arith.constant 0 : index
    %c0_0 = arith.constant 0 : index
    %c0_1 = arith.constant 0 : index
    %0 = vector.load %arg1[%c0, %c0_0, %c0_1] : memref<2x64x128xf32, #tpu.memory_space<vmem>>, vector<2x64x128xf32>
    %1 = vector.shape_cast %0 : vector<2x64x128xf32> to vector<128x128xf32>
    %c0_2 = arith.constant 0 : index
    %c0_3 = arith.constant 0 : index
    %2 = vector.load %arg2[%c0_2, %c0_3] : memref<128x384xf32, #tpu.memory_space<vmem>>, vector<128x384xf32>
    %cst = arith.constant dense<0.000000e+00> : vector<128x384xf32>
    %3 = tpu.matmul %1, %2, %cst {dimension_numbers = #tpu.dot_dimension_numbers<[1], [0], [0], [1], [0, 0, 1, 1], [], []>} : vector<128x128xf32>, vector<128x384xf32>, vector<128x384xf32> -> vector<128x384xf32>
    %4 = vector.extract_strided_slice %3 {offsets = [0, 0], sizes = [128, 128], strides = [1, 1]} : vector<128x384xf32> to vector<128x128xf32>
    %5 = vector.extract_strided_slice %3 {offsets = [0, 128], sizes = [128, 128], strides = [1, 1]} : vector<128x384xf32> to vector<128x128xf32>
    %6 = vector.extract_strided_slice %3 {offsets = [0, 256], sizes = [128, 128], strides = [1, 1]} : vector<128x384xf32> to vector<128x128xf32>
    %c0_4 = arith.constant 0 : index
    %c0_5 = arith.constant 0 : index
    %7 = vector.load %arg5[%c0_4, %c0_5] : memref<128x128xf32, #tpu.memory_space<vmem>>, vector<128x128xf32>
    %c1_i32 = arith.constant 1 : i32
    %8 = tpu.dynamic_rotate %4 by %c1_i32 dim 1 : vector<128x128xf32>, i32 -> vector<128x128xf32>
    %9 = arith.maximumf %4, %8 : vector<128x128xf32>
    %c2_i32 = arith.constant 2 : i32
    %10 = tpu.dynamic_rotate %9 by %c2_i32 dim 1 : vector<128x128xf32>, i32 -> vector<128x128xf32>
    %11 = arith.maximumf %9, %10 : vector<128x128xf32>
    %c4_i32 = arith.constant 4 : i32
    %12 = tpu.dynamic_rotate %11 by %c4_i32 dim 1 : vector<128x128xf32>, i32 -> vector<128x128xf32>
    %13 = arith.maximumf %11, %12 : vector<128x128xf32>
    %c0_6 = arith.constant 0 : index
    %c0_7 = arith.constant 0 : index
    %14 = vector.load %arg6[%c0_6, %c0_7] : memref<1x128xf32, #tpu.memory_space<vmem>>, vector<1x128xf32>
    %15 = vector.broadcast %14 : vector<1x128xf32> to vector<128x128xf32>
    %16 = arith.mulf %13, %15 : vector<128x128xf32>
    %cst_8 = arith.constant dense<0.000000e+00> : vector<128x128xf32>
    %17 = tpu.matmul %16, %7, %cst_8 {dimension_numbers = #tpu.dot_dimension_numbers<[1], [0], [0], [1], [0, 0, 1, 1], [], []>} : vector<128x128xf32>, vector<128x128xf32>, vector<128x128xf32> -> vector<128x128xf32>
    %18 = arith.subf %4, %17 : vector<128x128xf32>
    %19 = math.exp %18 : vector<128x128xf32>
    %cst_9 = arith.constant dense<0.000000e+00> : vector<128x128xf32>
    %20 = tpu.matmul %19, %7, %cst_9 {dimension_numbers = #tpu.dot_dimension_numbers<[1], [0], [0], [1], [0, 0, 1, 1], [], []>} : vector<128x128xf32>, vector<128x128xf32>, vector<128x128xf32> -> vector<128x128xf32>
    %cst_10 = arith.constant 1.000000e-30 : f32
    %21 = vector.broadcast %cst_10 : f32 to vector<128x128xf32>
    %22 = arith.maximumf %20, %21 : vector<128x128xf32>
    %23 = arith.divf %19, %22 : vector<128x128xf32>
    %cst_11 = arith.constant 0.353553385 : f32
    %24 = vector.broadcast %cst_11 : f32 to vector<128x128xf32>
    %25 = arith.mulf %23, %24 : vector<128x128xf32>
    %26 = vector.shape_cast %5 : vector<128x128xf32> to vector<2x64x128xf32>
    %cst_12 = arith.constant dense<0xFF800000> : vector<2x128xf32>
    %27 = vector.multi_reduction <maximumf>, %26, %cst_12 [1] : vector<2x64x128xf32> to vector<2x128xf32>
    %28 = vector.shape_cast %27 : vector<2x128xf32> to vector<2x1x128xf32>
    %29 = vector.broadcast %28 : vector<2x1x128xf32> to vector<2x64x128xf32>
    %30 = arith.subf %26, %29 : vector<2x64x128xf32>
    %31 = math.exp %30 : vector<2x64x128xf32>
    %cst_13 = arith.constant dense<0.000000e+00> : vector<2x128xf32>
    %32 = vector.multi_reduction <add>, %31, %cst_13 [1] : vector<2x64x128xf32> to vector<2x128xf32>
    %33 = vector.shape_cast %32 : vector<2x128xf32> to vector<2x1x128xf32>
    %34 = vector.broadcast %33 : vector<2x1x128xf32> to vector<2x64x128xf32>
    %35 = arith.divf %31, %34 : vector<2x64x128xf32>
    %36 = vector.shape_cast %6 : vector<128x128xf32> to vector<2x64x128xf32>
    %37 = vector.shape_cast %25 : vector<128x128xf32> to vector<2x64x128xf32>
    "tpu.trace_start"() <{level = 10 : i32, message = "pnd,pne->pde"}> : () -> ()
    %cst_14 = arith.constant dense<0.000000e+00> : vector<2x128x128xf32>
    %38 = tpu.matmul %35, %36, %cst_14 {dimension_numbers = #tpu.dot_dimension_numbers<[1], [1], [2], [2], [0, 0, 0, 2, 1, 2], [0], [0]>} : vector<2x64x128xf32>, vector<2x64x128xf32>, vector<2x128x128xf32> -> vector<2x128x128xf32>
    "tpu.trace_stop"() : () -> ()
    %39 = vector.shape_cast %7 : vector<128x128xf32> to vector<1x128x128xf32>
    %40 = vector.broadcast %39 : vector<1x128x128xf32> to vector<2x128x128xf32>
    %41 = arith.mulf %38, %40 : vector<2x128x128xf32>
    "tpu.trace_start"() <{level = 10 : i32, message = "pnd,pde->pne"}> : () -> ()
    %cst_15 = arith.constant dense<0.000000e+00> : vector<2x64x128xf32>
    %42 = tpu.matmul %37, %41, %cst_15 {dimension_numbers = #tpu.dot_dimension_numbers<[2], [1], [1], [2], [0, 0, 0, 1, 1, 2], [0], [0]>} : vector<2x64x128xf32>, vector<2x128x128xf32>, vector<2x64x128xf32> -> vector<2x64x128xf32>
    "tpu.trace_stop"() : () -> ()
    %43 = vector.shape_cast %42 : vector<2x64x128xf32> to vector<128x128xf32>
    %c0_16 = arith.constant 0 : index
    %c0_17 = arith.constant 0 : index
    %44 = vector.load %arg3[%c0_16, %c0_17] : memref<128x128xf32, #tpu.memory_space<vmem>>, vector<128x128xf32>
    %cst_18 = arith.constant dense<0.000000e+00> : vector<128x128xf32>
    %45 = tpu.matmul %43, %44, %cst_18 {dimension_numbers = #tpu.dot_dimension_numbers<[1], [0], [0], [1], [0, 0, 1, 1], [], []>} : vector<128x128xf32>, vector<128x128xf32>, vector<128x128xf32> -> vector<128x128xf32>
    %c0_19 = arith.constant 0 : index
    %c0_20 = arith.constant 0 : index
    %46 = vector.load %arg4[%c0_19, %c0_20] : memref<1x128xf32, #tpu.memory_space<vmem>>, vector<1x128xf32>
    %47 = vector.broadcast %46 : vector<1x128xf32> to vector<128x128xf32>
    %48 = arith.addf %45, %47 : vector<128x128xf32>
    %49 = vector.shape_cast %48 : vector<128x128xf32> to vector<2x64x128xf32>
    %50 = arith.addf %49, %0 : vector<2x64x128xf32>
    %c0_21 = arith.constant 0 : index
    %c0_22 = arith.constant 0 : index
    %c0_23 = arith.constant 0 : index
    %51 = vector.load %arg7[%c0_21, %c0_22, %c0_23] : memref<2x64x128xf32, #tpu.memory_space<vmem>>, vector<2x64x128xf32>
    tpu.vector_store %arg7[%c0_21, %c0_22, %c0_23], %50 {strides = array<i32>} : memref<2x64x128xf32, #tpu.memory_space<vmem>>, vector<2x64x128xf32>,
    return
  }
  func.func @transform_0(%arg0: i32) -> (i32, i32, i32) {
    %c0_i32 = arith.constant 0 : i32
    %c0_i32_0 = arith.constant 0 : i32
    %c0_i32_1 = arith.constant 0 : i32
    return %arg0, %c0_i32, %c0_i32_0 : i32, i32, i32
  }
  func.func @transform_1(%arg0: i32) -> (i32, i32) {
    %c0_i32 = arith.constant 0 : i32
    %c0_i32_0 = arith.constant 0 : i32
    %c0_i32_1 = arith.constant 0 : i32
    return %c0_i32, %c0_i32_0 : i32, i32
  }
  func.func @transform_2(%arg0: i32) -> (i32, i32) {
    %c0_i32 = arith.constant 0 : i32
    %c0_i32_0 = arith.constant 0 : i32
    %c0_i32_1 = arith.constant 0 : i32
    return %c0_i32, %c0_i32_0 : i32, i32
  }
  func.func @transform_3(%arg0: i32) -> (i32, i32) {
    %c0_i32 = arith.constant 0 : i32
    %c0_i32_0 = arith.constant 0 : i32
    %c0_i32_1 = arith.constant 0 : i32
    return %c0_i32, %c0_i32_0 : i32, i32
  }
  func.func @transform_4(%arg0: i32) -> (i32, i32) {
    %c0_i32 = arith.constant 0 : i32
    %c0_i32_0 = arith.constant 0 : i32
    %c0_i32_1 = arith.constant 0 : i32
    return %c0_i32, %c0_i32_0 : i32, i32
  }
  func.func @transform_5(%arg0: i32) -> (i32, i32) {
    %c0_i32 = arith.constant 0 : i32
    %c0_i32_0 = arith.constant 0 : i32
    %c0_i32_1 = arith.constant 0 : i32
    return %c0_i32, %c0_i32_0 : i32, i32
  }
  func.func @transform_6(%arg0: i32) -> (i32, i32, i32) {
    %c0_i32 = arith.constant 0 : i32
    %c0_i32_0 = arith.constant 0 : i32
    %c0_i32_1 = arith.constant 0 : i32
    return %arg0, %c0_i32, %c0_i32_0 : i32, i32, i32
  }
}

</mosaic_0001>

<llo_original>
// kernel: tpu_custom_call.1
$region0: #{tpu_custom_call.1}
  #allocation0 [shape = 'u32[]', space=smem, size = 0x4, offset = 0x4, fixed_abs, tag = 'smem constant byte address 0x4 - core index']
  #allocation1 [shape = 'u32[144,128]{1,0:T(1,128)}', space=vmem, size = 0x12000, scoped, tag = 'internal scratch']
  %s0 = inlined_call_operand.hbm [shape: f32[2,64,128], index: 0, kind: input, shape index: {}]
  %s1 = inlined_call_operand.hbm [shape: f32[128,384], index: 1, kind: input, shape index: {}]
  %s2 = inlined_call_operand.hbm [shape: f32[128,128], index: 2, kind: input, shape index: {}]
  %s3 = inlined_call_operand.vmem [shape: f32[1,128], index: 3, kind: input, shape index: {}]
  %s4 = inlined_call_operand.hbm [shape: f32[128,128], index: 4, kind: input, shape index: {}]
  %s5 = inlined_call_operand.vmem [shape: f32[1,128], index: 5, kind: input, shape index: {}]
  %s6 = inlined_call_operand.hbm [shape: f32[2,64,128], index: 6, kind: output, shape index: {}]
  %s7 = sld [smem:[#allocation0]]
  $region50: #{tpu_custom_call.1} parent=0
    _
  %s9 = ssub.s32 1, %s7
  %s10 = scalar_select 0, %s9, %s7
  $region1: #{tpu_custom_call.1} parent=0
    #allocation2 [shape = 'u8[65536]{0}', space=vmem, size = 0x10000, scoped, tag = 'input window, operand 0, single buffered']
    #allocation3 [shape = 's32[1]{0}', space=sflag, size = 0x4, scoped, tag = 'scoped memory for tpu_custom_call.1']
    #allocation4 [shape = 's32[1]{0}', space=sflag, size = 0x4, scoped, tag = 'scoped memory for tpu_custom_call.1']
    #allocation5 [shape = 'u8[196608]{0}', space=vmem, size = 0x30000, scoped, tag = 'input window, operand 1, single buffered']
    #allocation6 [shape = 's32[1]{0}', space=sflag, size = 0x4, scoped, tag = 'scoped memory for tpu_custom_call.1']
    #allocation7 [shape = 'u8[65536]{0}', space=vmem, size = 0x10000, scoped, tag = 'input window, operand 2, single buffered']
    #allocation8 [shape = 'u8[65536]{0}', space=vmem, size = 0x10000, scoped, tag = 'input window, operand 4, single buffered']
    #allocation9 [shape = 's32[1]{0}', space=sflag, size = 0x4, scoped, tag = 'scoped memory for tpu_custom_call.1']
    #allocation10 [shape = 'u8[65536]{0}', space=vmem, size = 0x10000, scoped, tag = 'output window, operand 0, single buffered']
    %11 = vsyncpa [#allocation3], 0
    %12 = vsyncpa [#allocation6], 0
    %13 = vsyncpa [#allocation9], 0
    %14 = vsyncpa [#allocation4], 0
    // Predicated region
    $region2: #{tpu_custom_call.1} parent=1 // pred_check
      _
    $region3: #{tpu_custom_call.1} parent=1 // pred_check_branch
      %16 = sbr.rel (0) target = $region5
    $region4: #{tpu_custom_call.1} parent=1 // pred_region
      %s18 = ssub.s32 2048, 2048
      %19 = vsyncadd [#allocation3], %s18
      %s20 = sshll.u32 [#allocation2], 4
      %s21 = int_to_ptr.vmem [resolvable:$true] %s20
      %26 = dma.hbm_to_vmem [thread:$0]  %s0, 2048, %s21, [#allocation3], 128, 128, 8
    $region5: #{tpu_custom_call.1} parent=1 // pred_fallthru
      _
    // Predicated region
    $region6: #{tpu_custom_call.1} parent=1 // pred_check
      _
    $region7: #{tpu_custom_call.1} parent=1 // pred_check_branch
      %28 = sbr.rel (0) target = $region9
    $region8: #{tpu_custom_call.1} parent=1 // pred_region
      %s30 = ssub.s32 6144, 6144
      %31 = vsyncadd [#allocation6], %s30
      %s32 = sshll.u32 [#allocation5], 4
      %s33 = int_to_ptr.vmem [resolvable:$true] %s32
      %38 = dma.hbm_to_vmem [thread:$0]  %s1, 6144, %s33, [#allocation6], 384, 384, 24
    $region9: #{tpu_custom_call.1} parent=1 // pred_fallthru
      _
    // Predicated region
    $region10: #{tpu_custom_call.1} parent=1 // pred_check
      _
    $region11: #{tpu_custom_call.1} parent=1 // pred_check_branch
      %40 = sbr.rel (0) target = $region13
    $region12: #{tpu_custom_call.1} parent=1 // pred_region
      %s42 = ssub.s32 2048, 2048
      %43 = vsyncadd [#allocation6], %s42
      %s44 = sshll.u32 [#allocation7], 4
      %s45 = int_to_ptr.vmem [resolvable:$true] %s44
      %50 = dma.hbm_to_vmem [thread:$0]  %s2, 2048, %s45, [#allocation6], 128, 128, 8
    $region13: #{tpu_custom_call.1} parent=1 // pred_fallthru
      _
    // Predicated region
    $region14: #{tpu_custom_call.1} parent=1 // pred_check
      _
    $region15: #{tpu_custom_call.1} parent=1 // pred_check_branch
      %52 = sbr.rel (0) target = $region17
    $region16: #{tpu_custom_call.1} parent=1 // pred_region
      _
    $region17: #{tpu_custom_call.1} parent=1 // pred_fallthru
      _
    // Predicated region
    $region18: #{tpu_custom_call.1} parent=1 // pred_check
      _
    $region19: #{tpu_custom_call.1} parent=1 // pred_check_branch
      %54 = sbr.rel (0) target = $region21
    $region20: #{tpu_custom_call.1} parent=1 // pred_region
      %s56 = ssub.s32 2048, 2048
      %57 = vsyncadd [#allocation9], %s56
      %s58 = sshll.u32 [#allocation8], 4
      %s59 = int_to_ptr.vmem [resolvable:$true] %s58
      %64 = dma.hbm_to_vmem [thread:$0]  %s4, 2048, %s59, [#allocation9], 128, 128, 8
    $region21: #{tpu_custom_call.1} parent=1 // pred_fallthru
      _
    // Predicated region
    $region22: #{tpu_custom_call.1} parent=1 // pred_check
      _
    $region23: #{tpu_custom_call.1} parent=1 // pred_check_branch
      %66 = sbr.rel (0) target = $region25
    $region24: #{tpu_custom_call.1} parent=1 // pred_region
      _
    $region25: #{tpu_custom_call.1} parent=1 // pred_fallthru
      _
    // Predicated region
    $region26: #{tpu_custom_call.1} parent=1 // pred_check
      _
    $region27: #{tpu_custom_call.1} parent=1 // pred_check_branch
      %68 = sbr.rel (0) target = $region29
    $region28: #{tpu_custom_call.1} parent=1 // pred_region
      %69 = dma.done [#allocation3], 2048
    $region29: #{tpu_custom_call.1} parent=1 // pred_fallthru
      _
    // Predicated region
    $region30: #{tpu_custom_call.1} parent=1 // pred_check
      _
    $region31: #{tpu_custom_call.1} parent=1 // pred_check_branch
      %71 = sbr.rel (0) target = $region33
    $region32: #{tpu_custom_call.1} parent=1 // pred_region
      %72 = dma.done [#allocation6], 6144
    $region33: #{tpu_custom_call.1} parent=1 // pred_fallthru
      _
    // Predicated region
    $region34: #{tpu_custom_call.1} parent=1 // pred_check
      _
    $region35: #{tpu_custom_call.1} parent=1 // pred_check_branch
      %74 = sbr.rel (0) target = $region37
    $region36: #{tpu_custom_call.1} parent=1 // pred_region
      %75 = dma.done [#allocation6], 2048
    $region37: #{tpu_custom_call.1} parent=1 // pred_fallthru
      _
    // Predicated region
    $region38: #{tpu_custom_call.1} parent=1 // pred_check
      _
    $region39: #{tpu_custom_call.1} parent=1 // pred_check_branch
      %77 = sbr.rel (0) target = $region41
    $region40: #{tpu_custom_call.1} parent=1 // pred_region
      %78 = dma.done [#allocation9], 2048
    $region41: #{tpu_custom_call.1} parent=1 // pred_fallthru
      _
    %v79 = vld [vmem:[#allocation2] sm:$0xff]
    %v80 = vld [vmem:[#allocation2 + $0x8] sm:$0xff]
    %v81 = vld [vmem:[#allocation2 + $0x10] sm:$0xff]
    %v82 = vld [vmem:[#allocation2 + $0x18] sm:$0xff]
    %v83 = vld [vmem:[#allocation2 + $0x20] sm:$0xff]
    %v84 = vld [vmem:[#allocation2 + $0x28] sm:$0xff]
    %v85 = vld [vmem:[#allocation2 + $0x30] sm:$0xff]
    %v86 = vld [vmem:[#allocation2 + $0x38] sm:$0xff]
    %v87 = vld [vmem:[#allocation2 + $0x40] sm:$0xff]
    %v88 = vld [vmem:[#allocation2 + $0x48] sm:$0xff]
    %v89 = vld [vmem:[#allocation2 + $0x50] sm:$0xff]
    %v90 = vld [vmem:[#allocation2 + $0x58] sm:$0xff]
    %v91 = vld [vmem:[#allocation2 + $0x60] sm:$0xff]
    %v92 = vld [vmem:[#allocation2 + $0x68] sm:$0xff]
    %v93 = vld [vmem:[#allocation2 + $0x70] sm:$0xff]
    %v94 = vld [vmem:[#allocation2 + $0x78] sm:$0xff]
    %v95 = vld [vmem:[#allocation5] sm:$0xff]
    %v96 = vld [vmem:[#allocation5 + $0x8] sm:$0xff]
    %v97 = vld [vmem:[#allocation5 + $0x10] sm:$0xff]
    %v98 = vld [vmem:[#allocation5 + $0x18] sm:$0xff]
    %v99 = vld [vmem:[#allocation5 + $0x20] sm:$0xff]
    %v100 = vld [vmem:[#allocation5 + $0x28] sm:$0xff]
    %v101 = vld [vmem:[#allocation5 + $0x30] sm:$0xff]
    %v102 = vld [vmem:[#allocation5 + $0x38] sm:$0xff]
    %v103 = vld [vmem:[#allocation5 + $0x40] sm:$0xff]
    %v104 = vld [vmem:[#allocation5 + $0x48] sm:$0xff]
    %v105 = vld [vmem:[#allocation5 + $0x50] sm:$0xff]
    %v106 = vld [vmem:[#allocation5 + $0x58] sm:$0xff]
    %v107 = vld [vmem:[#allocation5 + $0x60] sm:$0xff]
    %v108 = vld [vmem:[#allocation5 + $0x68] sm:$0xff]
    %v109 = vld [vmem:[#allocation5 + $0x70] sm:$0xff]
    %v110 = vld [vmem:[#allocation5 + $0x78] sm:$0xff]
    %v111 = vld [vmem:[#allocation5 + $0x80] sm:$0xff]
    %v112 = vld [vmem:[#allocation5 + $0x88] sm:$0xff]
    %v113 = vld [vmem:[#allocation5 + $0x90] sm:$0xff]
    %v114 = vld [vmem:[#allocation5 + $0x98] sm:$0xff]
    %v115 = vld [vmem:[#allocation5 + $0xa0] sm:$0xff]
    %v116 = vld [vmem:[#allocation5 + $0xa8] sm:$0xff]
    %v117 = vld [vmem:[#allocation5 + $0xb0] sm:$0xff]
    %v118 = vld [vmem:[#allocation5 + $0xb8] sm:$0xff]
    %v119 = vld [vmem:[#allocation5 + $0xc0] sm:$0xff]
    %v120 = vld [vmem:[#allocation5 + $0xc8] sm:$0xff]
    %v121 = vld [vmem:[#allocation5 + $0xd0] sm:$0xff]
    %v122 = vld [vmem:[#allocation5 + $0xd8] sm:$0xff]
    %v123 = vld [vmem:[#allocation5 + $0xe0] sm:$0xff]
    %v124 = vld [vmem:[#allocation5 + $0xe8] sm:$0xff]
    %v125 = vld [vmem:[#allocation5 + $0xf0] sm:$0xff]
    %v126 = vld [vmem:[#allocation5 + $0xf8] sm:$0xff]
    %v127 = vld [vmem:[#allocation5 + $0x100] sm:$0xff]
    %v128 = vld [vmem:[#allocation5 + $0x108] sm:$0xff]
    %v129 = vld [vmem:[#allocation5 + $0x110] sm:$0xff]
    %v130 = vld [vmem:[#allocation5 + $0x118] sm:$0xff]
    %v131 = vld [vmem:[#allocation5 + $0x120] sm:$0xff]
    %v132 = vld [vmem:[#allocation5 + $0x128] sm:$0xff]
    %v133 = vld [vmem:[#allocation5 + $0x130] sm:$0xff]
    %v134 = vld [vmem:[#allocation5 + $0x138] sm:$0xff]
    %v135 = vld [vmem:[#allocation5 + $0x140] sm:$0xff]
    %v136 = vld [vmem:[#allocation5 + $0x148] sm:$0xff]
    %v137 = vld [vmem:[#allocation5 + $0x150] sm:$0xff]
    %v138 = vld [vmem:[#allocation5 + $0x158] sm:$0xff]
    %v139 = vld [vmem:[#allocation5 + $0x160] sm:$0xff]
    %v140 = vld [vmem:[#allocation5 + $0x168] sm:$0xff]
    %v141 = vld [vmem:[#allocation5 + $0x170] sm:$0xff]
    %v142 = vld [vmem:[#allocation5 + $0x178] sm:$0xff]
    %143 = vmatprep.subr.mxu0 %v96
    %144 = vmatpush1.msra.mxu0 %v95
    %145 = vmatprep.subr.mxu0 %v99
    %146 = vmatpush1.msra.mxu0 %v98
    %147 = vmatprep.subr.mxu0 %v102
    %148 = vmatpush1.msra.mxu0 %v101
    %149 = vmatprep.subr.mxu0 %v105
    %150 = vmatpush1.msra.mxu0 %v104
    %151 = vmatprep.subr.mxu0 %v108
    %152 = vmatpush1.msra.mxu0 %v107
    %153 = vmatprep.subr.mxu0 %v111
    %154 = vmatpush1.msra.mxu0 %v110
    %155 = vmatprep.subr.mxu0 %v114
    %156 = vmatpush1.msra.mxu0 %v113
    %157 = vmatprep.subr.mxu0 %v117
    %158 = vmatpush1.msra.mxu0 %v116
    %159 = vmatprep.subr.mxu0 %v120
    %160 = vmatpush1.msra.mxu0 %v119
    %161 = vmatprep.subr.mxu0 %v123
    %162 = vmatpush1.msra.mxu0 %v122
    %163 = vmatprep.subr.mxu0 %v126
    %164 = vmatpush1.msra.mxu0 %v125
    %165 = vmatprep.subr.mxu0 %v129
    %166 = vmatpush1.msra.mxu0 %v128
    %167 = vmatprep.subr.mxu0 %v132
    %168 = vmatpush1.msra.mxu0 %v131
    %169 = vmatprep.subr.mxu0 %v135
    %170 = vmatpush1.msra.mxu0 %v134
    %171 = vmatprep.subr.mxu0 %v138
    %172 = vmatpush1.msra.mxu0 %v137
    %173 = vmatprep.subr.mxu0 %v141
    %174 = vmatpush1.msra.mxu0 %v140
    %175 = vmatprep.subr.mxu0 0.0
    %176 = vmatpush1.msra.mxu0 0.0
    %177 = vmatprep.subr.mxu0 0.0
    %178 = vmatpush1.msra.mxu0 0.0
    %179 = vmatprep.subr.mxu0 0.0
    %180 = vmatpush1.msra.mxu0 0.0
    %181 = vmatprep.subr.mxu0 0.0
    %182 = vmatpush1.msra.mxu0 0.0
    %183 = vmatprep.subr.mxu0 0.0
    %184 = vmatpush1.msra.mxu0 0.0
    %185 = vmatprep.subr.mxu0 0.0
    %186 = vmatpush1.msra.mxu0 0.0
    %187 = vmatprep.subr.mxu0 0.0
    %188 = vmatpush1.msra.mxu0 0.0
    %189 = vmatprep.subr.mxu0 0.0
    %190 = vmatpush1.msra.mxu0 0.0
    %191 = vmatprep.subr.mxu0 0.0
    %192 = vmatpush1.msra.mxu0 0.0
    %193 = vmatprep.subr.mxu0 0.0
    %194 = vmatpush1.msra.mxu0 0.0
    %195 = vmatprep.subr.mxu0 0.0
    %196 = vmatpush1.msra.mxu0 0.0
    %197 = vmatprep.subr.mxu0 0.0
    %198 = vmatpush1.msra.mxu0 0.0
    %199 = vmatprep.subr.mxu0 0.0
    %200 = vmatpush1.msra.mxu0 0.0
    %201 = vmatprep.subr.mxu0 0.0
    %202 = vmatpush1.msra.mxu0 0.0
    %203 = vmatprep.subr.mxu0 0.0
    %204 = vmatpush1.msra.mxu0 0.0
    %205 = vmatprep.subr.mxu0 0.0
    %206 = vmatpush1.msra.mxu0 0.0
    %207 = vmatprep.mubr.f32.mxu0 0.0
    %208 = vmatmul.mubr.f32.gmra.mrb[0].mxu0 %v79
    %v209 = vpop.f32.mrb[0].mxu0
    %v210 = vadd.f32 0.0, %v209
    %v211 = vpop.f32.mrb[0].mxu0
    %v212 = vadd.f32 0.0, %v211
    %213 = vmatprep.mubr.f32.mxu0 0.0
    %214 = vmatmul.mubr.f32.gmra.mrb[0].mxu0 %v80
    %v215 = vpop.f32.mrb[0].mxu0
    %v216 = vadd.f32 0.0, %v215
    %v217 = vpop.f32.mrb[0].mxu0
    %v218 = vadd.f32 0.0, %v217
    %219 = vmatprep.mubr.f32.mxu0 0.0
    %220 = vmatmul.mubr.f32.gmra.mrb[0].mxu0 %v81
    %v221 = vpop.f32.mrb[0].mxu0
    %v222 = vadd.f32 0.0, %v221
    %v223 = vpop.f32.mrb[0].mxu0
    %v224 = vadd.f32 0.0, %v223
    %225 = vmatprep.mubr.f32.mxu0 0.0
    %226 = vmatmul.mubr.f32.gmra.mrb[0].mxu0 %v82
    %v227 = vpop.f32.mrb[0].mxu0
    %v228 = vadd.f32 0.0, %v227
    %v229 = vpop.f32.mrb[0].mxu0
    %v230 = vadd.f32 0.0, %v229
    %231 = vmatprep.mubr.f32.mxu0 0.0
    %232 = vmatmul.mubr.f32.gmra.mrb[0].mxu0 %v83
    %v233 = vpop.f32.mrb[0].mxu0
    %v234 = vadd.f32 0.0, %v233
    %v235 = vpop.f32.mrb[0].mxu0
    %v236 = vadd.f32 0.0, %v235
    %237 = vmatprep.mubr.f32.mxu0 0.0
    %238 = vmatmul.mubr.f32.gmra.mrb[0].mxu0 %v84
    %v239 = vpop.f32.mrb[0].mxu0
    %v240 = vadd.f32 0.0, %v239
    %v241 = vpop.f32.mrb[0].mxu0
    %v242 = vadd.f32 0.0, %v241
    %243 = vmatprep.mubr.f32.mxu0 0.0
    %244 = vmatmul.mubr.f32.gmra.mrb[0].mxu0 %v85
    %v245 = vpop.f32.mrb[0].mxu0
    %v246 = vadd.f32 0.0, %v245
    %v247 = vpop.f32.mrb[0].mxu0
    %v248 = vadd.f32 0.0, %v247
    %249 = vmatprep.mubr.f32.mxu0 0.0
    %250 = vmatmul.mubr.f32.gmra.mrb[0].mxu0 %v86
    %v251 = vpop.f32.mrb[0].mxu0
    %v252 = vadd.f32 0.0, %v251
    %v253 = vpop.f32.mrb[0].mxu0
    %v254 = vadd.f32 0.0, %v253
    %255 = vmatprep.mubr.f32.mxu0 0.0
    %256 = vmatmul.mubr.f32.gmra.mrb[0].mxu0 %v87
    %v257 = vpop.f32.mrb[0].mxu0
    %v258 = vadd.f32 0.0, %v257
    %v259 = vpop.f32.mrb[0].mxu0
    %v260 = vadd.f32 0.0, %v259
    %261 = vmatprep.mubr.f32.mxu0 0.0
    %262 = vmatmul.mubr.f32.gmra.mrb[0].mxu0 %v88
    %v263 = vpop.f32.mrb[0].mxu0
    %v264 = vadd.f32 0.0, %v263
    %v265 = vpop.f32.mrb[0].mxu0
    %v266 = vadd.f32 0.0, %v265
    %267 = vmatprep.mubr.f32.mxu0 0.0
    %268 = vmatmul.mubr.f32.gmra.mrb[0].mxu0 %v89
    %v269 = vpop.f32.mrb[0].mxu0
    %v270 = vadd.f32 0.0, %v269
    %v271 = vpop.f32.mrb[0].mxu0
    %v272 = vadd.f32 0.0, %v271
    %273 = vmatprep.mubr.f32.mxu0 0.0
    %274 = vmatmul.mubr.f32.gmra.mrb[0].mxu0 %v90
    %v275 = vpop.f32.mrb[0].mxu0
    %v276 = vadd.f32 0.0, %v275
    %v277 = vpop.f32.mrb[0].mxu0
    %v278 = vadd.f32 0.0, %v277
    %279 = vmatprep.mubr.f32.mxu0 0.0
    %280 = vmatmul.mubr.f32.gmra.mrb[0].mxu0 %v91
    %v281 = vpop.f32.mrb[0].mxu0
    %v282 = vadd.f32 0.0, %v281
    %v283 = vpop.f32.mrb[0].mxu0
    %v284 = vadd.f32 0.0, %v283
    %285 = vmatprep.mubr.f32.mxu0 0.0
    %286 = vmatmul.mubr.f32.gmra.mrb[0].mxu0 %v92
    %v287 = vpop.f32.mrb[0].mxu0
    %v288 = vadd.f32 0.0, %v287
    %v289 = vpop.f32.mrb[0].mxu0
    %v290 = vadd.f32 0.0, %v289
    %291 = vmatprep.mubr.f32.mxu0 0.0
    %292 = vmatmul.mubr.f32.gmra.mrb[0].mxu0 %v93
    %v293 = vpop.f32.mrb[0].mxu0
    %v294 = vadd.f32 0.0, %v293
    %v295 = vpop.f32.mrb[0].mxu0
    %v296 = vadd.f32 0.0, %v295
    %297 = vmatprep.mubr.f32.mxu0 0.0
    %298 = vmatmul.mubr.f32.gmra.mrb[0].mxu0 %v94
    %v299 = vpop.f32.mrb[0].mxu0
    %v300 = vadd.f32 0.0, %v299
    %v301 = vpop.f32.mrb[0].mxu0
    %v302 = vadd.f32 0.0, %v301
    %303 = vdwg.mxu0
    %304 = vmatprep.subr.mxu0 0.0
    %305 = vmatpush1.msra.mxu0 %v97
    %306 = vmatprep.subr.mxu0 0.0
    %307 = vmatpush1.msra.mxu0 %v100
    %308 = vmatprep.subr.mxu0 0.0
    %309 = vmatpush1.msra.mxu0 %v103
    %310 = vmatprep.subr.mxu0 0.0
    %311 = vmatpush1.msra.mxu0 %v106
    %312 = vmatprep.subr.mxu0 0.0
    %313 = vmatpush1.msra.mxu0 %v109
    %314 = vmatprep.subr.mxu0 0.0
    %315 = vmatpush1.msra.mxu0 %v112
    %316 = vmatprep.subr.mxu0 0.0
    %317 = vmatpush1.msra.mxu0 %v115
    %318 = vmatprep.subr.mxu0 0.0
    %319 = vmatpush1.msra.mxu0 %v118
    %320 = vmatprep.subr.mxu0 0.0
    %321 = vmatpush1.msra.mxu0 %v121
    %322 = vmatprep.subr.mxu0 0.0
    %323 = vmatpush1.msra.mxu0 %v124
    %324 = vmatprep.subr.mxu0 0.0
    %325 = vmatpush1.msra.mxu0 %v127
    %326 = vmatprep.subr.mxu0 0.0
    %327 = vmatpush1.msra.mxu0 %v130
    %328 = vmatprep.subr.mxu0 0.0
    %329 = vmatpush1.msra.mxu0 %v133
    %330 = vmatprep.subr.mxu0 0.0
    %331 = vmatpush1.msra.mxu0 %v136
    %332 = vmatprep.subr.mxu0 0.0
    %333 = vmatpush1.msra.mxu0 %v139
    %334 = vmatprep.subr.mxu0 0.0
    %335 = vmatpush1.msra.mxu0 %v142
    %336 = vmatprep.subr.mxu0 0.0
    %337 = vmatpush1.msra.mxu0 0.0
    %338 = vmatprep.subr.mxu0 0.0
    %339 = vmatpush1.msra.mxu0 0.0
    %340 = vmatprep.subr.mxu0 0.0
    %341 = vmatpush1.msra.mxu0 0.0
    %342 = vmatprep.subr.mxu0 0.0
    %343 = vmatpush1.msra.mxu0 0.0
    %344 = vmatprep.subr.mxu0 0.0
    %345 = vmatpush1.msra.mxu0 0.0
    %346 = vmatprep.subr.mxu0 0.0
    %347 = vmatpush1.msra.mxu0 0.0
    %348 = vmatprep.subr.mxu0 0.0
    %349 = vmatpush1.msra.mxu0 0.0
    %350 = vmatprep.subr.mxu0 0.0
    %351 = vmatpush1.msra.mxu0 0.0
    %352 = vmatprep.subr.mxu0 0.0
    %353 = vmatpush1.msra.mxu0 0.0
    %354 = vmatprep.subr.mxu0 0.0
    %355 = vmatpush1.msra.mxu0 0.0
    %356 = vmatprep.subr.mxu0 0.0
    %357 = vmatpush1.msra.mxu0 0.0
    %358 = vmatprep.subr.mxu0 0.0
    %359 = vmatpush1.msra.mxu0 0.0
    %360 = vmatprep.subr.mxu0 0.0
    %361 = vmatpush1.msra.mxu0 0.0
    %362 = vmatprep.subr.mxu0 0.0
    %363 = vmatpush1.msra.mxu0 0.0
    %364 = vmatprep.subr.mxu0 0.0
    %365 = vmatpush1.msra.mxu0 0.0
    %366 = vmatprep.subr.mxu0 0.0
    %367 = vmatpush1.msra.mxu0 0.0
    %368 = vmatprep.mubr.f32.mxu0 0.0
    %369 = vmatmul.mubr.f32.gmra.mrb[0].mxu0 %v79
    %v370 = vpop.f32.mrb[0].mxu0
    %v371 = vadd.f32 0.0, %v370
    %v372 = vpop.f32.mrb[0].mxu0
    %373 = vmatprep.mubr.f32.mxu0 0.0
    %374 = vmatmul.mubr.f32.gmra.mrb[0].mxu0 %v80
    %v375 = vpop.f32.mrb[0].mxu0
    %v376 = vadd.f32 0.0, %v375
    %v377 = vpop.f32.mrb[0].mxu0
    %378 = vmatprep.mubr.f32.mxu0 0.0
    %379 = vmatmul.mubr.f32.gmra.mrb[0].mxu0 %v81
    %v380 = vpop.f32.mrb[0].mxu0
    %v381 = vadd.f32 0.0, %v380
    %v382 = vpop.f32.mrb[0].mxu0
    %383 = vmatprep.mubr.f32.mxu0 0.0
    %384 = vmatmul.mubr.f32.gmra.mrb[0].mxu0 %v82
    %v385 = vpop.f32.mrb[0].mxu0
    %v386 = vadd.f32 0.0, %v385
    %v387 = vpop.f32.mrb[0].mxu0
    %388 = vmatprep.mubr.f32.mxu0 0.0
    %389 = vmatmul.mubr.f32.gmra.mrb[0].mxu0 %v83
    %v390 = vpop.f32.mrb[0].mxu0
    %v391 = vadd.f32 0.0, %v390
    %v392 = vpop.f32.mrb[0].mxu0
    %393 = vmatprep.mubr.f32.mxu0 0.0
    %394 = vmatmul.mubr.f32.gmra.mrb[0].mxu0 %v84
    %v395 = vpop.f32.mrb[0].mxu0
    %v396 = vadd.f32 0.0, %v395
    %v397 = vpop.f32.mrb[0].mxu0
    %398 = vmatprep.mubr.f32.mxu0 0.0
    %399 = vmatmul.mubr.f32.gmra.mrb[0].mxu0 %v85
    %v400 = vpop.f32.mrb[0].mxu0
    %v401 = vadd.f32 0.0, %v400
    %v402 = vpop.f32.mrb[0].mxu0
    %403 = vmatprep.mubr.f32.mxu0 0.0
    %404 = vmatmul.mubr.f32.gmra.mrb[0].mxu0 %v86
    %v405 = vpop.f32.mrb[0].mxu0
    %v406 = vadd.f32 0.0, %v405
    %v407 = vpop.f32.mrb[0].mxu0
    %408 = vmatprep.mubr.f32.mxu0 0.0
    %409 = vmatmul.mubr.f32.gmra.mrb[0].mxu0 %v87
    %v410 = vpop.f32.mrb[0].mxu0
    %v411 = vadd.f32 0.0, %v410
    %v412 = vpop.f32.mrb[0].mxu0
    %413 = vmatprep.mubr.f32.mxu0 0.0
    %414 = vmatmul.mubr.f32.gmra.mrb[0].mxu0 %v88
    %v415 = vpop.f32.mrb[0].mxu0
    %v416 = vadd.f32 0.0, %v415
    %v417 = vpop.f32.mrb[0].mxu0
    %418 = vmatprep.mubr.f32.mxu0 0.0
    %419 = vmatmul.mubr.f32.gmra.mrb[0].mxu0 %v89
    %v420 = vpop.f32.mrb[0].mxu0
    %v421 = vadd.f32 0.0, %v420
    %v422 = vpop.f32.mrb[0].mxu0
    %423 = vmatprep.mubr.f32.mxu0 0.0
    %424 = vmatmul.mubr.f32.gmra.mrb[0].mxu0 %v90
    %v425 = vpop.f32.mrb[0].mxu0
    %v426 = vadd.f32 0.0, %v425
    %v427 = vpop.f32.mrb[0].mxu0
    %428 = vmatprep.mubr.f32.mxu0 0.0
    %429 = vmatmul.mubr.f32.gmra.mrb[0].mxu0 %v91
    %v430 = vpop.f32.mrb[0].mxu0
    %v431 = vadd.f32 0.0, %v430
    %v432 = vpop.f32.mrb[0].mxu0
    %433 = vmatprep.mubr.f32.mxu0 0.0
    %434 = vmatmul.mubr.f32.gmra.mrb[0].mxu0 %v92
    %v435 = vpop.f32.mrb[0].mxu0
    %v436 = vadd.f32 0.0, %v435
    %v437 = vpop.f32.mrb[0].mxu0
    %438 = vmatprep.mubr.f32.mxu0 0.0
    %439 = vmatmul.mubr.f32.gmra.mrb[0].mxu0 %v93
    %v440 = vpop.f32.mrb[0].mxu0
    %v441 = vadd.f32 0.0, %v440
    %v442 = vpop.f32.mrb[0].mxu0
    %443 = vmatprep.mubr.f32.mxu0 0.0
    %444 = vmatmul.mubr.f32.gmra.mrb[0].mxu0 %v94
    %v445 = vpop.f32.mrb[0].mxu0
    %v446 = vadd.f32 0.0, %v445
    %v447 = vpop.f32.mrb[0].mxu0
    %448 = vdwg.mxu0
    %v449 = vld [vmem:[#allocation8] sm:$0xff]
    %v450 = vld [vmem:[#allocation8 + $0x8] sm:$0xff]
    %v451 = vld [vmem:[#allocation8 + $0x10] sm:$0xff]
    %v452 = vld [vmem:[#allocation8 + $0x18] sm:$0xff]
    %v453 = vld [vmem:[#allocation8 + $0x20] sm:$0xff]
    %v454 = vld [vmem:[#allocation8 + $0x28] sm:$0xff]
    %v455 = vld [vmem:[#allocation8 + $0x30] sm:$0xff]
    %v456 = vld [vmem:[#allocation8 + $0x38] sm:$0xff]
    %v457 = vld [vmem:[#allocation8 + $0x40] sm:$0xff]
    %v458 = vld [vmem:[#allocation8 + $0x48] sm:$0xff]
    %v459 = vld [vmem:[#allocation8 + $0x50] sm:$0xff]
    %v460 = vld [vmem:[#allocation8 + $0x58] sm:$0xff]
    %v461 = vld [vmem:[#allocation8 + $0x60] sm:$0xff]
    %v462 = vld [vmem:[#allocation8 + $0x68] sm:$0xff]
    %v463 = vld [vmem:[#allocation8 + $0x70] sm:$0xff]
    %v464 = vld [vmem:[#allocation8 + $0x78] sm:$0xff]
    %465 = vrot.lane.b32.xlu0 %v210, 1
    %v466 = vpop.permute.xlu0 %465
    %467 = vrot.lane.b32.xlu0 %v216, 1
    %v468 = vpop.permute.xlu0 %467
    %469 = vrot.lane.b32.xlu0 %v222, 1
    %v470 = vpop.permute.xlu0 %469
    %471 = vrot.lane.b32.xlu0 %v228, 1
    %v472 = vpop.permute.xlu0 %471
    %473 = vrot.lane.b32.xlu0 %v234, 1
    %v474 = vpop.permute.xlu0 %473
    %475 = vrot.lane.b32.xlu0 %v240, 1
    %v476 = vpop.permute.xlu0 %475
    %477 = vrot.lane.b32.xlu0 %v246, 1
    %v478 = vpop.permute.xlu0 %477
    %479 = vrot.lane.b32.xlu0 %v252, 1
    %v480 = vpop.permute.xlu0 %479
    %481 = vrot.lane.b32.xlu0 %v258, 1
    %v482 = vpop.permute.xlu0 %481
    %483 = vrot.lane.b32.xlu0 %v264, 1
    %v484 = vpop.permute.xlu0 %483
    %485 = vrot.lane.b32.xlu0 %v270, 1
    %v486 = vpop.permute.xlu0 %485
    %487 = vrot.lane.b32.xlu0 %v276, 1
    %v488 = vpop.permute.xlu0 %487
    %489 = vrot.lane.b32.xlu0 %v282, 1
    %v490 = vpop.permute.xlu0 %489
    %491 = vrot.lane.b32.xlu0 %v288, 1
    %v492 = vpop.permute.xlu0 %491
    %493 = vrot.lane.b32.xlu0 %v294, 1
    %v494 = vpop.permute.xlu0 %493
    %495 = vrot.lane.b32.xlu0 %v300, 1
    %v496 = vpop.permute.xlu0 %495
    %v497 = vmax.f32 %v210, %v466
    %v498 = vmax.f32 %v216, %v468
    %v499 = vmax.f32 %v222, %v470
    %v500 = vmax.f32 %v228, %v472
    %v501 = vmax.f32 %v234, %v474
    %v502 = vmax.f32 %v240, %v476
    %v503 = vmax.f32 %v246, %v478
    %v504 = vmax.f32 %v252, %v480
    %v505 = vmax.f32 %v258, %v482
    %v506 = vmax.f32 %v264, %v484
    %v507 = vmax.f32 %v270, %v486
    %v508 = vmax.f32 %v276, %v488
    %v509 = vmax.f32 %v282, %v490
    %v510 = vmax.f32 %v288, %v492
    %v511 = vmax.f32 %v294, %v494
    %v512 = vmax.f32 %v300, %v496
    %513 = vrot.lane.b32.xlu0 %v497, 2
    %v514 = vpop.permute.xlu0 %513
    %515 = vrot.lane.b32.xlu0 %v498, 2
    %v516 = vpop.permute.xlu0 %515
    %517 = vrot.lane.b32.xlu0 %v499, 2
    %v518 = vpop.permute.xlu0 %517
    %519 = vrot.lane.b32.xlu0 %v500, 2
    %v520 = vpop.permute.xlu0 %519
    %521 = vrot.lane.b32.xlu0 %v501, 2
    %v522 = vpop.permute.xlu0 %521
    %523 = vrot.lane.b32.xlu0 %v502, 2
    %v524 = vpop.permute.xlu0 %523
    %525 = vrot.lane.b32.xlu0 %v503, 2
    %v526 = vpop.permute.xlu0 %525
    %527 = vrot.lane.b32.xlu0 %v504, 2
    %v528 = vpop.permute.xlu0 %527
    %529 = vrot.lane.b32.xlu0 %v505, 2
    %v530 = vpop.permute.xlu0 %529
    %531 = vrot.lane.b32.xlu0 %v506, 2
    %v532 = vpop.permute.xlu0 %531
    %533 = vrot.lane.b32.xlu0 %v507, 2
    %v534 = vpop.permute.xlu0 %533
    %535 = vrot.lane.b32.xlu0 %v508, 2
    %v536 = vpop.permute.xlu0 %535
    %537 = vrot.lane.b32.xlu0 %v509, 2
    %v538 = vpop.permute.xlu0 %537
    %539 = vrot.lane.b32.xlu0 %v510, 2
    %v540 = vpop.permute.xlu0 %539
    %541 = vrot.lane.b32.xlu0 %v511, 2
    %v542 = vpop.permute.xlu0 %541
    %543 = vrot.lane.b32.xlu0 %v512, 2
    %v544 = vpop.permute.xlu0 %543
    %v545 = vmax.f32 %v497, %v514
    %v546 = vmax.f32 %v498, %v516
    %v547 = vmax.f32 %v499, %v518
    %v548 = vmax.f32 %v500, %v520
    %v549 = vmax.f32 %v501, %v522
    %v550 = vmax.f32 %v502, %v524
    %v551 = vmax.f32 %v503, %v526
    %v552 = vmax.f32 %v504, %v528
    %v553 = vmax.f32 %v505, %v530
    %v554 = vmax.f32 %v506, %v532
    %v555 = vmax.f32 %v507, %v534
    %v556 = vmax.f32 %v508, %v536
    %v557 = vmax.f32 %v509, %v538
    %v558 = vmax.f32 %v510, %v540
    %v559 = vmax.f32 %v511, %v542
    %v560 = vmax.f32 %v512, %v544
    %561 = vrot.lane.b32.xlu0 %v545, 4
    %v562 = vpop.permute.xlu0 %561
    %563 = vrot.lane.b32.xlu0 %v546, 4
    %v564 = vpop.permute.xlu0 %563
    %565 = vrot.lane.b32.xlu0 %v547, 4
    %v566 = vpop.permute.xlu0 %565
    %567 = vrot.lane.b32.xlu0 %v548, 4
    %v568 = vpop.permute.xlu0 %567
    %569 = vrot.lane.b32.xlu0 %v549, 4
    %v570 = vpop.permute.xlu0 %569
    %571 = vrot.lane.b32.xlu0 %v550, 4
    %v572 = vpop.permute.xlu0 %571
    %573 = vrot.lane.b32.xlu0 %v551, 4
    %v574 = vpop.permute.xlu0 %573
    %575 = vrot.lane.b32.xlu0 %v552, 4
    %v576 = vpop.permute.xlu0 %575
    %577 = vrot.lane.b32.xlu0 %v553, 4
    %v578 = vpop.permute.xlu0 %577
    %579 = vrot.lane.b32.xlu0 %v554, 4
    %v580 = vpop.permute.xlu0 %579
    %581 = vrot.lane.b32.xlu0 %v555, 4
    %v582 = vpop.permute.xlu0 %581
    %583 = vrot.lane.b32.xlu0 %v556, 4
    %v584 = vpop.permute.xlu0 %583
    %585 = vrot.lane.b32.xlu0 %v557, 4
    %v586 = vpop.permute.xlu0 %585
    %587 = vrot.lane.b32.xlu0 %v558, 4
    %v588 = vpop.permute.xlu0 %587
    %589 = vrot.lane.b32.xlu0 %v559, 4
    %v590 = vpop.permute.xlu0 %589
    %591 = vrot.lane.b32.xlu0 %v560, 4
    %v592 = vpop.permute.xlu0 %591
    %v593 = vmax.f32 %v545, %v562
    %v594 = vmax.f32 %v546, %v564
    %v595 = vmax.f32 %v547, %v566
    %v596 = vmax.f32 %v548, %v568
    %v597 = vmax.f32 %v549, %v570
    %v598 = vmax.f32 %v550, %v572
    %v599 = vmax.f32 %v551, %v574
    %v600 = vmax.f32 %v552, %v576
    %v601 = vmax.f32 %v553, %v578
    %v602 = vmax.f32 %v554, %v580
    %v603 = vmax.f32 %v555, %v582
    %v604 = vmax.f32 %v556, %v584
    %v605 = vmax.f32 %v557, %v586
    %v606 = vmax.f32 %v558, %v588
    %v607 = vmax.f32 %v559, %v590
    %v608 = vmax.f32 %v560, %v592
    %v609 = vld [vmem:[%s5] sm:$0x1]
    %v611 = vlaneseq
    %v612 = vshrl.u32 %v611, 7
    %v613 = vsub.s32 0, %v612
    %v614 = vrot.slane %v609, %v613
    %v616 = vmul.f32 %v593, %v614
    %v617 = vmul.f32 %v594, %v614
    %v618 = vmul.f32 %v595, %v614
    %v619 = vmul.f32 %v596, %v614
    %v620 = vmul.f32 %v597, %v614
    %v621 = vmul.f32 %v598, %v614
    %v622 = vmul.f32 %v599, %v614
    %v623 = vmul.f32 %v600, %v614
    %v624 = vmul.f32 %v601, %v614
    %v625 = vmul.f32 %v602, %v614
    %v626 = vmul.f32 %v603, %v614
    %v627 = vmul.f32 %v604, %v614
    %v628 = vmul.f32 %v605, %v614
    %v629 = vmul.f32 %v606, %v614
    %v630 = vmul.f32 %v607, %v614
    %v631 = vmul.f32 %v608, %v614
    %632 = vmatprep.subr.mxu0 0.0
    %633 = vmatpush1.msra.mxu0 %v449
    %634 = vmatprep.subr.mxu0 0.0
    %635 = vmatpush1.msra.mxu0 %v450
    %636 = vmatprep.subr.mxu0 0.0
    %637 = vmatpush1.msra.mxu0 %v451
    %638 = vmatprep.subr.mxu0 0.0
    %639 = vmatpush1.msra.mxu0 %v452
    %640 = vmatprep.subr.mxu0 0.0
    %641 = vmatpush1.msra.mxu0 %v453
    %642 = vmatprep.subr.mxu0 0.0
    %643 = vmatpush1.msra.mxu0 %v454
    %644 = vmatprep.subr.mxu0 0.0
    %645 = vmatpush1.msra.mxu0 %v455
    %646 = vmatprep.subr.mxu0 0.0
    %647 = vmatpush1.msra.mxu0 %v456
    %648 = vmatprep.subr.mxu0 0.0
    %649 = vmatpush1.msra.mxu0 %v457
    %650 = vmatprep.subr.mxu0 0.0
    %651 = vmatpush1.msra.mxu0 %v458
    %652 = vmatprep.subr.mxu0 0.0
    %653 = vmatpush1.msra.mxu0 %v459
    %654 = vmatprep.subr.mxu0 0.0
    %655 = vmatpush1.msra.mxu0 %v460
    %656 = vmatprep.subr.mxu0 0.0
    %657 = vmatpush1.msra.mxu0 %v461
    %658 = vmatprep.subr.mxu0 0.0
    %659 = vmatpush1.msra.mxu0 %v462
    %660 = vmatprep.subr.mxu0 0.0
    %661 = vmatpush1.msra.mxu0 %v463
    %662 = vmatprep.subr.mxu0 0.0
    %663 = vmatpush1.msra.mxu0 %v464
    %664 = vmatprep.subr.mxu0 0.0
    %665 = vmatpush1.msra.mxu0 0.0
    %666 = vmatprep.subr.mxu0 0.0
    %667 = vmatpush1.msra.mxu0 0.0
    %668 = vmatprep.subr.mxu0 0.0
    %669 = vmatpush1.msra.mxu0 0.0
    %670 = vmatprep.subr.mxu0 0.0
    %671 = vmatpush1.msra.mxu0 0.0
    %672 = vmatprep.subr.mxu0 0.0
    %673 = vmatpush1.msra.mxu0 0.0
    %674 = vmatprep.subr.mxu0 0.0
    %675 = vmatpush1.msra.mxu0 0.0
    %676 = vmatprep.subr.mxu0 0.0
    %677 = vmatpush1.msra.mxu0 0.0
    %678 = vmatprep.subr.mxu0 0.0
    %679 = vmatpush1.msra.mxu0 0.0
    %680 = vmatprep.subr.mxu0 0.0
    %681 = vmatpush1.msra.mxu0 0.0
    %682 = vmatprep.subr.mxu0 0.0
    %683 = vmatpush1.msra.mxu0 0.0
    %684 = vmatprep.subr.mxu0 0.0
    %685 = vmatpush1.msra.mxu0 0.0
    %686 = vmatprep.subr.mxu0 0.0
    %687 = vmatpush1.msra.mxu0 0.0
    %688 = vmatprep.subr.mxu0 0.0
    %689 = vmatpush1.msra.mxu0 0.0
    %690 = vmatprep.subr.mxu0 0.0
    %691 = vmatpush1.msra.mxu0 0.0
    %692 = vmatprep.subr.mxu0 0.0
    %693 = vmatpush1.msra.mxu0 0.0
    %694 = vmatprep.subr.mxu0 0.0
    %695 = vmatpush1.msra.mxu0 0.0
    %696 = vmatprep.mubr.f32.mxu0 0.0
    %697 = vmatmul.mubr.f32.gmra.mrb[0].mxu0 %v616
    %v698 = vpop.f32.mrb[0].mxu0
    %v699 = vadd.f32 0.0, %v698
    %v700 = vpop.f32.mrb[0].mxu0
    %701 = vmatprep.mubr.f32.mxu0 0.0
    %702 = vmatmul.mubr.f32.gmra.mrb[0].mxu0 %v617
    %v703 = vpop.f32.mrb[0].mxu0
    %v704 = vadd.f32 0.0, %v703
    %v705 = vpop.f32.mrb[0].mxu0
    %706 = vmatprep.mubr.f32.mxu0 0.0
    %707 = vmatmul.mubr.f32.gmra.mrb[0].mxu0 %v618
    %v708 = vpop.f32.mrb[0].mxu0
    %v709 = vadd.f32 0.0, %v708
    %v710 = vpop.f32.mrb[0].mxu0
    %711 = vmatprep.mubr.f32.mxu0 0.0
    %712 = vmatmul.mubr.f32.gmra.mrb[0].mxu0 %v619
    %v713 = vpop.f32.mrb[0].mxu0
    %v714 = vadd.f32 0.0, %v713
    %v715 = vpop.f32.mrb[0].mxu0
    %716 = vmatprep.mubr.f32.mxu0 0.0
    %717 = vmatmul.mubr.f32.gmra.mrb[0].mxu0 %v620
    %v718 = vpop.f32.mrb[0].mxu0
    %v719 = vadd.f32 0.0, %v718
    %v720 = vpop.f32.mrb[0].mxu0
    %721 = vmatprep.mubr.f32.mxu0 0.0
    %722 = vmatmul.mubr.f32.gmra.mrb[0].mxu0 %v621
    %v723 = vpop.f32.mrb[0].mxu0
    %v724 = vadd.f32 0.0, %v723
    %v725 = vpop.f32.mrb[0].mxu0
    %726 = vmatprep.mubr.f32.mxu0 0.0
    %727 = vmatmul.mubr.f32.gmra.mrb[0].mxu0 %v622
    %v728 = vpop.f32.mrb[0].mxu0
    %v729 = vadd.f32 0.0, %v728
    %v730 = vpop.f32.mrb[0].mxu0
    %731 = vmatprep.mubr.f32.mxu0 0.0
    %732 = vmatmul.mubr.f32.gmra.mrb[0].mxu0 %v623
    %v733 = vpop.f32.mrb[0].mxu0
    %v734 = vadd.f32 0.0, %v733
    %v735 = vpop.f32.mrb[0].mxu0
    %736 = vmatprep.mubr.f32.mxu0 0.0
    %737 = vmatmul.mubr.f32.gmra.mrb[0].mxu0 %v624
    %v738 = vpop.f32.mrb[0].mxu0
    %v739 = vadd.f32 0.0, %v738
    %v740 = vpop.f32.mrb[0].mxu0
    %741 = vmatprep.mubr.f32.mxu0 0.0
    %742 = vmatmul.mubr.f32.gmra.mrb[0].mxu0 %v625
    %v743 = vpop.f32.mrb[0].mxu0
    %v744 = vadd.f32 0.0, %v743
    %v745 = vpop.f32.mrb[0].mxu0
    %746 = vmatprep.mubr.f32.mxu0 0.0
    %747 = vmatmul.mubr.f32.gmra.mrb[0].mxu0 %v626
    %v748 = vpop.f32.mrb[0].mxu0
    %v749 = vadd.f32 0.0, %v748
    %v750 = vpop.f32.mrb[0].mxu0
    %751 = vmatprep.mubr.f32.mxu0 0.0
    %752 = vmatmul.mubr.f32.gmra.mrb[0].mxu0 %v627
    %v753 = vpop.f32.mrb[0].mxu0
    %v754 = vadd.f32 0.0, %v753
    %v755 = vpop.f32.mrb[0].mxu0
    %756 = vmatprep.mubr.f32.mxu0 0.0
    %757 = vmatmul.mubr.f32.gmra.mrb[0].mxu0 %v628
    %v758 = vpop.f32.mrb[0].mxu0
    %v759 = vadd.f32 0.0, %v758
    %v760 = vpop.f32.mrb[0].mxu0
    %761 = vmatprep.mubr.f32.mxu0 0.0
    %762 = vmatmul.mubr.f32.gmra.mrb[0].mxu0 %v629
    %v763 = vpop.f32.mrb[0].mxu0
    %v764 = vadd.f32 0.0, %v763
    %v765 = vpop.f32.mrb[0].mxu0
    %766 = vmatprep.mubr.f32.mxu0 0.0
    %767 = vmatmul.mubr.f32.gmra.mrb[0].mxu0 %v630
    %v768 = vpop.f32.mrb[0].mxu0
    %v769 = vadd.f32 0.0, %v768
    %v770 = vpop.f32.mrb[0].mxu0
    %771 = vmatprep.mubr.f32.mxu0 0.0
    %772 = vmatmul.mubr.f32.gmra.mrb[0].mxu0 %v631
    %v773 = vpop.f32.mrb[0].mxu0
    %v774 = vadd.f32 0.0, %v773
    %v775 = vpop.f32.mrb[0].mxu0
    %776 = vdwg.mxu0
    %v777 = vsub.f32 %v210, %v699
    %v778 = vsub.f32 %v216, %v704
    %v779 = vsub.f32 %v222, %v709
    %v780 = vsub.f32 %v228, %v714
    %v781 = vsub.f32 %v234, %v719
    %v782 = vsub.f32 %v240, %v724
    %v783 = vsub.f32 %v246, %v729
    %v784 = vsub.f32 %v252, %v734
    %v785 = vsub.f32 %v258, %v739
    %v786 = vsub.f32 %v264, %v744
    %v787 = vsub.f32 %v270, %v749
    %v788 = vsub.f32 %v276, %v754
    %v789 = vsub.f32 %v282, %v759
    %v790 = vsub.f32 %v288, %v764
    %v791 = vsub.f32 %v294, %v769
    %v792 = vsub.f32 %v300, %v774
    %v793 = vmul.f32 %v777, 1.442695
    %v794 = vpow.pop %v793
    %v795 = vmul.f32 %v778, 1.442695
    %v796 = vpow.pop %v795
    %v797 = vmul.f32 %v779, 1.442695
    %v798 = vpow.pop %v797
    %v799 = vmul.f32 %v780, 1.442695
    %v800 = vpow.pop %v799
    %v801 = vmul.f32 %v781, 1.442695
    %v802 = vpow.pop %v801
    %v803 = vmul.f32 %v782, 1.442695
    %v804 = vpow.pop %v803
    %v805 = vmul.f32 %v783, 1.442695
    %v806 = vpow.pop %v805
    %v807 = vmul.f32 %v784, 1.442695
    %v808 = vpow.pop %v807
    %v809 = vmul.f32 %v785, 1.442695
    %v810 = vpow.pop %v809
    %v811 = vmul.f32 %v786, 1.442695
    %v812 = vpow.pop %v811
    %v813 = vmul.f32 %v787, 1.442695
    %v814 = vpow.pop %v813
    %v815 = vmul.f32 %v788, 1.442695
    %v816 = vpow.pop %v815
    %v817 = vmul.f32 %v789, 1.442695
    %v818 = vpow.pop %v817
    %v819 = vmul.f32 %v790, 1.442695
    %v820 = vpow.pop %v819
    %v821 = vmul.f32 %v791, 1.442695
    %v822 = vpow.pop %v821
    %v823 = vmul.f32 %v792, 1.442695
    %v824 = vpow.pop %v823
    %825 = vmatprep.subr.mxu0 0.0
    %826 = vmatpush1.msra.mxu0 %v449
    %827 = vmatprep.subr.mxu0 0.0
    %828 = vmatpush1.msra.mxu0 %v450
    %829 = vmatprep.subr.mxu0 0.0
    %830 = vmatpush1.msra.mxu0 %v451
    %831 = vmatprep.subr.mxu0 0.0
    %832 = vmatpush1.msra.mxu0 %v452
    %833 = vmatprep.subr.mxu0 0.0
    %834 = vmatpush1.msra.mxu0 %v453
    %835 = vmatprep.subr.mxu0 0.0
    %836 = vmatpush1.msra.mxu0 %v454
    %837 = vmatprep.subr.mxu0 0.0
    %838 = vmatpush1.msra.mxu0 %v455
    %839 = vmatprep.subr.mxu0 0.0
    %840 = vmatpush1.msra.mxu0 %v456
    %841 = vmatprep.subr.mxu0 0.0
    %842 = vmatpush1.msra.mxu0 %v457
    %843 = vmatprep.subr.mxu0 0.0
    %844 = vmatpush1.msra.mxu0 %v458
    %845 = vmatprep.subr.mxu0 0.0
    %846 = vmatpush1.msra.mxu0 %v459
    %847 = vmatprep.subr.mxu0 0.0
    %848 = vmatpush1.msra.mxu0 %v460
    %849 = vmatprep.subr.mxu0 0.0
    %850 = vmatpush1.msra.mxu0 %v461
    %851 = vmatprep.subr.mxu0 0.0
    %852 = vmatpush1.msra.mxu0 %v462
    %853 = vmatprep.subr.mxu0 0.0
    %854 = vmatpush1.msra.mxu0 %v463
    %855 = vmatprep.subr.mxu0 0.0
    %856 = vmatpush1.msra.mxu0 %v464
    %857 = vmatprep.subr.mxu0 0.0
    %858 = vmatpush1.msra.mxu0 0.0
    %859 = vmatprep.subr.mxu0 0.0
    %860 = vmatpush1.msra.mxu0 0.0
    %861 = vmatprep.subr.mxu0 0.0
    %862 = vmatpush1.msra.mxu0 0.0
    %863 = vmatprep.subr.mxu0 0.0
    %864 = vmatpush1.msra.mxu0 0.0
    %865 = vmatprep.subr.mxu0 0.0
    %866 = vmatpush1.msra.mxu0 0.0
    %867 = vmatprep.subr.mxu0 0.0
    %868 = vmatpush1.msra.mxu0 0.0
    %869 = vmatprep.subr.mxu0 0.0
    %870 = vmatpush1.msra.mxu0 0.0
    %871 = vmatprep.subr.mxu0 0.0
    %872 = vmatpush1.msra.mxu0 0.0
    %873 = vmatprep.subr.mxu0 0.0
    %874 = vmatpush1.msra.mxu0 0.0
    %875 = vmatprep.subr.mxu0 0.0
    %876 = vmatpush1.msra.mxu0 0.0
    %877 = vmatprep.subr.mxu0 0.0
    %878 = vmatpush1.msra.mxu0 0.0
    %879 = vmatprep.subr.mxu0 0.0
    %880 = vmatpush1.msra.mxu0 0.0
    %881 = vmatprep.subr.mxu0 0.0
    %882 = vmatpush1.msra.mxu0 0.0
    %883 = vmatprep.subr.mxu0 0.0
    %884 = vmatpush1.msra.mxu0 0.0
    %885 = vmatprep.subr.mxu0 0.0
    %886 = vmatpush1.msra.mxu0 0.0
    %887 = vmatprep.subr.mxu0 0.0
    %888 = vmatpush1.msra.mxu0 0.0
    %889 = vmatprep.mubr.f32.mxu0 0.0
    %890 = vmatmul.mubr.f32.gmra.mrb[0].mxu0 %v794
    %v891 = vpop.f32.mrb[0].mxu0
    %v892 = vadd.f32 0.0, %v891
    %v893 = vpop.f32.mrb[0].mxu0
    %894 = vmatprep.mubr.f32.mxu0 0.0
    %895 = vmatmul.mubr.f32.gmra.mrb[0].mxu0 %v796
    %v896 = vpop.f32.mrb[0].mxu0
    %v897 = vadd.f32 0.0, %v896
    %v898 = vpop.f32.mrb[0].mxu0
    %899 = vmatprep.mubr.f32.mxu0 0.0
    %900 = vmatmul.mubr.f32.gmra.mrb[0].mxu0 %v798
    %v901 = vpop.f32.mrb[0].mxu0
    %v902 = vadd.f32 0.0, %v901
    %v903 = vpop.f32.mrb[0].mxu0
    %904 = vmatprep.mubr.f32.mxu0 0.0
    %905 = vmatmul.mubr.f32.gmra.mrb[0].mxu0 %v800
    %v906 = vpop.f32.mrb[0].mxu0
    %v907 = vadd.f32 0.0, %v906
    %v908 = vpop.f32.mrb[0].mxu0
    %909 = vmatprep.mubr.f32.mxu0 0.0
    %910 = vmatmul.mubr.f32.gmra.mrb[0].mxu0 %v802
    %v911 = vpop.f32.mrb[0].mxu0
    %v912 = vadd.f32 0.0, %v911
    %v913 = vpop.f32.mrb[0].mxu0
    %914 = vmatprep.mubr.f32.mxu0 0.0
    %915 = vmatmul.mubr.f32.gmra.mrb[0].mxu0 %v804
    %v916 = vpop.f32.mrb[0].mxu0
    %v917 = vadd.f32 0.0, %v916
    %v918 = vpop.f32.mrb[0].mxu0
    %919 = vmatprep.mubr.f32.mxu0 0.0
    %920 = vmatmul.mubr.f32.gmra.mrb[0].mxu0 %v806
    %v921 = vpop.f32.mrb[0].mxu0
    %v922 = vadd.f32 0.0, %v921
    %v923 = vpop.f32.mrb[0].mxu0
    %924 = vmatprep.mubr.f32.mxu0 0.0
    %925 = vmatmul.mubr.f32.gmra.mrb[0].mxu0 %v808
    %v926 = vpop.f32.mrb[0].mxu0
    %v927 = vadd.f32 0.0, %v926
    %v928 = vpop.f32.mrb[0].mxu0
    %929 = vmatprep.mubr.f32.mxu0 0.0
    %930 = vmatmul.mubr.f32.gmra.mrb[0].mxu0 %v810
    %v931 = vpop.f32.mrb[0].mxu0
    %v932 = vadd.f32 0.0, %v931
    %v933 = vpop.f32.mrb[0].mxu0
    %934 = vmatprep.mubr.f32.mxu0 0.0
    %935 = vmatmul.mubr.f32.gmra.mrb[0].mxu0 %v812
    %v936 = vpop.f32.mrb[0].mxu0
    %v937 = vadd.f32 0.0, %v936
    %v938 = vpop.f32.mrb[0].mxu0
    %939 = vmatprep.mubr.f32.mxu0 0.0
    %940 = vmatmul.mubr.f32.gmra.mrb[0].mxu0 %v814
    %v941 = vpop.f32.mrb[0].mxu0
    %v942 = vadd.f32 0.0, %v941
    %v943 = vpop.f32.mrb[0].mxu0
    %944 = vmatprep.mubr.f32.mxu0 0.0
    %945 = vmatmul.mubr.f32.gmra.mrb[0].mxu0 %v816
    %v946 = vpop.f32.mrb[0].mxu0
    %v947 = vadd.f32 0.0, %v946
    %v948 = vpop.f32.mrb[0].mxu0
    %949 = vmatprep.mubr.f32.mxu0 0.0
    %950 = vmatmul.mubr.f32.gmra.mrb[0].mxu0 %v818
    %v951 = vpop.f32.mrb[0].mxu0
    %v952 = vadd.f32 0.0, %v951
    %v953 = vpop.f32.mrb[0].mxu0
    %954 = vmatprep.mubr.f32.mxu0 0.0
    %955 = vmatmul.mubr.f32.gmra.mrb[0].mxu0 %v820
    %v956 = vpop.f32.mrb[0].mxu0
    %v957 = vadd.f32 0.0, %v956
    %v958 = vpop.f32.mrb[0].mxu0
    %959 = vmatprep.mubr.f32.mxu0 0.0
    %960 = vmatmul.mubr.f32.gmra.mrb[0].mxu0 %v822
    %v961 = vpop.f32.mrb[0].mxu0
    %v962 = vadd.f32 0.0, %v961
    %v963 = vpop.f32.mrb[0].mxu0
    %964 = vmatprep.mubr.f32.mxu0 0.0
    %965 = vmatmul.mubr.f32.gmra.mrb[0].mxu0 %v824
    %v966 = vpop.f32.mrb[0].mxu0
    %v967 = vadd.f32 0.0, %v966
    %v968 = vpop.f32.mrb[0].mxu0
    %969 = vdwg.mxu0
    %v970 = vmax.f32 %v892, 1e-30
    %v971 = vmax.f32 %v897, 1e-30
    %v972 = vmax.f32 %v902, 1e-30
    %v973 = vmax.f32 %v907, 1e-30
    %v974 = vmax.f32 %v912, 1e-30
    %v975 = vmax.f32 %v917, 1e-30
    %v976 = vmax.f32 %v922, 1e-30
    %v977 = vmax.f32 %v927, 1e-30
    %v978 = vmax.f32 %v932, 1e-30
    %v979 = vmax.f32 %v937, 1e-30
    %v980 = vmax.f32 %v942, 1e-30
    %v981 = vmax.f32 %v947, 1e-30
    %v982 = vmax.f32 %v952, 1e-30
    %v983 = vmax.f32 %v957, 1e-30
    %v984 = vmax.f32 %v962, 1e-30
    %v985 = vmax.f32 %v967, 1e-30
    %v986 = vrcp.pop %v970
    %v987 = vmul.f32 %v794, %v986
    %v988 = vrcp.pop %v971
    %v989 = vmul.f32 %v796, %v988
    %v990 = vrcp.pop %v972
    %v991 = vmul.f32 %v798, %v990
    %v992 = vrcp.pop %v973
    %v993 = vmul.f32 %v800, %v992
    %v994 = vrcp.pop %v974
    %v995 = vmul.f32 %v802, %v994
    %v996 = vrcp.pop %v975
    %v997 = vmul.f32 %v804, %v996
    %v998 = vrcp.pop %v976
    %v999 = vmul.f32 %v806, %v998
    %v1000 = vrcp.pop %v977
    %v1001 = vmul.f32 %v808, %v1000
    %v1002 = vrcp.pop %v978
    %v1003 = vmul.f32 %v810, %v1002
    %v1004 = vrcp.pop %v979
    %v1005 = vmul.f32 %v812, %v1004
    %v1006 = vrcp.pop %v980
    %v1007 = vmul.f32 %v814, %v1006
    %v1008 = vrcp.pop %v981
    %v1009 = vmul.f32 %v816, %v1008
    %v1010 = vrcp.pop %v982
    %v1011 = vmul.f32 %v818, %v1010
    %v1012 = vrcp.pop %v983
    %v1013 = vmul.f32 %v820, %v1012
    %v1014 = vrcp.pop %v984
    %v1015 = vmul.f32 %v822, %v1014
    %v1016 = vrcp.pop %v985
    %v1017 = vmul.f32 %v824, %v1016
    %v1018 = vmul.f32 %v987, 0.35355338
    %v1019 = vmul.f32 %v989, 0.35355338
    %v1020 = vmul.f32 %v991, 0.35355338
    %v1021 = vmul.f32 %v993, 0.35355338
    %v1022 = vmul.f32 %v995, 0.35355338
    %v1023 = vmul.f32 %v997, 0.35355338
    %v1024 = vmul.f32 %v999, 0.35355338
    %v1025 = vmul.f32 %v1001, 0.35355338
    %v1026 = vmul.f32 %v1003, 0.35355338
    %v1027 = vmul.f32 %v1005, 0.35355338
    %v1028 = vmul.f32 %v1007, 0.35355338
    %v1029 = vmul.f32 %v1009, 0.35355338
    %v1030 = vmul.f32 %v1011, 0.35355338
    %v1031 = vmul.f32 %v1013, 0.35355338
    %v1032 = vmul.f32 %v1015, 0.35355338
    %v1033 = vmul.f32 %v1017, 0.35355338
    %v1034 = vmax.f32 %v212, %v224
    %v1035 = vmax.f32 %v218, %v230
    %v1036 = vmax.f32 %v1034, %v236
    %v1037 = vmax.f32 %v1035, %v242
    %v1038 = vmax.f32 %v1036, %v248
    %v1039 = vmax.f32 %v1037, %v254
    %v1040 = vmax.f32 %v1038, %v1039
    %v1041 = vrot.slane %v1040, 4
    %v1042 = vmax.f32 %v1040, %v1041
    %v1043 = vrot.slane %v1042, 2
    %v1044 = vmax.f32 %v1042, %v1043
    %v1045 = vrot.slane %v1044, 1
    %v1046 = vmax.f32 %v1044, %v1045
    %v1047 = vmax.f32 %v260, %v272
    %v1048 = vmax.f32 %v266, %v278
    %v1049 = vmax.f32 %v1047, %v284
    %v1050 = vmax.f32 %v1048, %v290
    %v1051 = vmax.f32 %v1049, %v296
    %v1052 = vmax.f32 %v1050, %v302
    %v1053 = vmax.f32 %v1051, %v1052
    %v1054 = vrot.slane %v1053, 4
    %v1055 = vmax.f32 %v1053, %v1054
    %v1056 = vrot.slane %v1055, 2
    %v1057 = vmax.f32 %v1055, %v1056
    %v1058 = vrot.slane %v1057, 1
    %v1059 = vmax.f32 %v1057, %v1058
    %v1060 = vsub.f32 %v212, %v1046
    %v1061 = vsub.f32 %v218, %v1046
    %v1062 = vsub.f32 %v224, %v1046
    %v1063 = vsub.f32 %v230, %v1046
    %v1064 = vsub.f32 %v236, %v1046
    %v1065 = vsub.f32 %v242, %v1046
    %v1066 = vsub.f32 %v248, %v1046
    %v1067 = vsub.f32 %v254, %v1046
    %v1068 = vsub.f32 %v260, %v1059
    %v1069 = vsub.f32 %v266, %v1059
    %v1070 = vsub.f32 %v272, %v1059
    %v1071 = vsub.f32 %v278, %v1059
    %v1072 = vsub.f32 %v284, %v1059
    %v1073 = vsub.f32 %v290, %v1059
    %v1074 = vsub.f32 %v296, %v1059
    %v1075 = vsub.f32 %v302, %v1059
    %v1076 = vmul.f32 %v1060, 1.442695
    %v1077 = vpow.pop %v1076
    %v1078 = vmul.f32 %v1061, 1.442695
    %v1079 = vpow.pop %v1078
    %v1080 = vmul.f32 %v1062, 1.442695
    %v1081 = vpow.pop %v1080
    %v1082 = vmul.f32 %v1063, 1.442695
    %v1083 = vpow.pop %v1082
    %v1084 = vmul.f32 %v1064, 1.442695
    %v1085 = vpow.pop %v1084
    %v1086 = vmul.f32 %v1065, 1.442695
    %v1087 = vpow.pop %v1086
    %v1088 = vmul.f32 %v1066, 1.442695
    %v1089 = vpow.pop %v1088
    %v1090 = vmul.f32 %v1067, 1.442695
    %v1091 = vpow.pop %v1090
    %v1092 = vmul.f32 %v1068, 1.442695
    %v1093 = vpow.pop %v1092
    %v1094 = vmul.f32 %v1069, 1.442695
    %v1095 = vpow.pop %v1094
    %v1096 = vmul.f32 %v1070, 1.442695
    %v1097 = vpow.pop %v1096
    %v1098 = vmul.f32 %v1071, 1.442695
    %v1099 = vpow.pop %v1098
    %v1100 = vmul.f32 %v1072, 1.442695
    %v1101 = vpow.pop %v1100
    %v1102 = vmul.f32 %v1073, 1.442695
    %v1103 = vpow.pop %v1102
    %v1104 = vmul.f32 %v1074, 1.442695
    %v1105 = vpow.pop %v1104
    %v1106 = vmul.f32 %v1075, 1.442695
    %v1107 = vpow.pop %v1106
    %v1108 = vadd.f32 %v1077, %v1079
    %v1109 = vadd.f32 %v1108, %v1081
    %v1110 = vadd.f32 %v1109, %v1083
    %v1111 = vadd.f32 %v1110, %v1085
    %v1112 = vadd.f32 %v1111, %v1087
    %v1113 = vadd.f32 %v1112, %v1089
    %v1114 = vadd.f32 %v1113, %v1091
    %v1115 = vrot.slane %v1114, 4
    %v1116 = vadd.f32 %v1114, %v1115
    %v1117 = vrot.slane %v1116, 2
    %v1118 = vadd.f32 %v1116, %v1117
    %v1119 = vrot.slane %v1118, 1
    %v1120 = vadd.f32 %v1118, %v1119
    %v1121 = vadd.f32 %v1093, %v1095
    %v1122 = vadd.f32 %v1121, %v1097
    %v1123 = vadd.f32 %v1122, %v1099
    %v1124 = vadd.f32 %v1123, %v1101
    %v1125 = vadd.f32 %v1124, %v1103
    %v1126 = vadd.f32 %v1125, %v1105
    %v1127 = vadd.f32 %v1126, %v1107
    %v1128 = vrot.slane %v1127, 4
    %v1129 = vadd.f32 %v1127, %v1128
    %v1130 = vrot.slane %v1129, 2
    %v1131 = vadd.f32 %v1129, %v1130
    %v1132 = vrot.slane %v1131, 1
    %v1133 = vadd.f32 %v1131, %v1132
    %v1134 = vrcp.pop %v1120
    %v1135 = vmul.f32 %v1077, %v1134
    %v1136 = vmul.f32 %v1079, %v1134
    %v1137 = vmul.f32 %v1081, %v1134
    %v1138 = vmul.f32 %v1083, %v1134
    %v1139 = vmul.f32 %v1085, %v1134
    %v1140 = vmul.f32 %v1087, %v1134
    %v1141 = vmul.f32 %v1089, %v1134
    %v1142 = vmul.f32 %v1091, %v1134
    %v1143 = vrcp.pop %v1133
    %v1144 = vmul.f32 %v1093, %v1143
    %v1145 = vmul.f32 %v1095, %v1143
    %v1146 = vmul.f32 %v1097, %v1143
    %v1147 = vmul.f32 %v1099, %v1143
    %v1148 = vmul.f32 %v1101, %v1143
    %v1149 = vmul.f32 %v1103, %v1143
    %v1150 = vmul.f32 %v1105, %v1143
    %v1151 = vmul.f32 %v1107, %v1143
    %1152 = vxpose.xlu0.b32.start [1/16] %v1135, 128
    %1153 = vxpose.xlu0.b32.cont [2/16] %v1136, 128
    %1154 = vxpose.xlu0.b32.cont [3/16] %v1137, 128
    %1155 = vxpose.xlu0.b32.cont [4/16] %v1138, 128
    %1156 = vxpose.xlu0.b32.cont [5/16] %v1139, 128
    %1157 = vxpose.xlu0.b32.cont [6/16] %v1140, 128
    %1158 = vxpose.xlu0.b32.cont [7/16] %v1141, 128
    %1159 = vxpose.xlu0.b32.cont [8/16] %v1142, 128
    %1160 = vxpose.xlu0.b32.cont [9/16] 0.0, 128
    %1161 = vxpose.xlu0.b32.cont [10/16] 0.0, 128
    %1162 = vxpose.xlu0.b32.cont [11/16] 0.0, 128
    %1163 = vxpose.xlu0.b32.cont [12/16] 0.0, 128
    %1164 = vxpose.xlu0.b32.cont [13/16] 0.0, 128
    %1165 = vxpose.xlu0.b32.cont [14/16] 0.0, 128
    %1166 = vxpose.xlu0.b32.cont [15/16] 0.0, 128
    %1167 = vxpose.xlu0.b32.end [16/16] 0.0, 128
    %v1168 = vpop.trf.xlu0
    %v1169 = vpop.trf.xlu0
    %v1170 = vpop.trf.xlu0
    %v1171 = vpop.trf.xlu0
    %v1172 = vpop.trf.xlu0
    %v1173 = vpop.trf.xlu0
    %v1174 = vpop.trf.xlu0
    %v1175 = vpop.trf.xlu0
    %v1176 = vpop.trf.xlu0
    %v1177 = vpop.trf.xlu0
    %v1178 = vpop.trf.xlu0
    %v1179 = vpop.trf.xlu0
    %v1180 = vpop.trf.xlu0
    %v1181 = vpop.trf.xlu0
    %v1182 = vpop.trf.xlu0
    %v1183 = vpop.trf.xlu0
    %vm1184 = vcmask 523264
    %v1186 = vsel %vm1184, %v1168, 0
    %v1189 = vsel %vm1184, %v1169, 0
    %v1192 = vsel %vm1184, %v1170, 0
    %v1195 = vsel %vm1184, %v1171, 0
    %v1198 = vsel %vm1184, %v1172, 0
    %v1201 = vsel %vm1184, %v1173, 0
    %v1204 = vsel %vm1184, %v1174, 0
    %v1207 = vsel %vm1184, %v1175, 0
    %v1210 = vsel %vm1184, %v1176, 0
    %v1213 = vsel %vm1184, %v1177, 0
    %v1216 = vsel %vm1184, %v1178, 0
    %v1219 = vsel %vm1184, %v1179, 0
    %v1222 = vsel %vm1184, %v1180, 0
    %v1225 = vsel %vm1184, %v1181, 0
    %v1228 = vsel %vm1184, %v1182, 0
    %v1231 = vsel %vm1184, %v1183, 0
    %1233 = vmatprep.subr.mxu0 0.0
    %1234 = vmatpush1.msra.mxu0 %v371
    %1235 = vmatprep.subr.mxu0 0.0
    %1236 = vmatpush1.msra.mxu0 %v376
    %1237 = vmatprep.subr.mxu0 0.0
    %1238 = vmatpush1.msra.mxu0 %v381
    %1239 = vmatprep.subr.mxu0 0.0
    %1240 = vmatpush1.msra.mxu0 %v386
    %1241 = vmatprep.subr.mxu0 0.0
    %1242 = vmatpush1.msra.mxu0 %v391
    %1243 = vmatprep.subr.mxu0 0.0
    %1244 = vmatpush1.msra.mxu0 %v396
    %1245 = vmatprep.subr.mxu0 0.0
    %1246 = vmatpush1.msra.mxu0 %v401
    %1247 = vmatprep.subr.mxu0 0.0
    %1248 = vmatpush1.msra.mxu0 %v406
    %1249 = vmatprep.subr.mxu0 0.0
    %1250 = vmatpush1.msra.mxu0 0.0
    %1251 = vmatprep.subr.mxu0 0.0
    %1252 = vmatpush1.msra.mxu0 0.0
    %1253 = vmatprep.subr.mxu0 0.0
    %1254 = vmatpush1.msra.mxu0 0.0
    %1255 = vmatprep.subr.mxu0 0.0
    %1256 = vmatpush1.msra.mxu0 0.0
    %1257 = vmatprep.subr.mxu0 0.0
    %1258 = vmatpush1.msra.mxu0 0.0
    %1259 = vmatprep.subr.mxu0 0.0
    %1260 = vmatpush1.msra.mxu0 0.0
    %1261 = vmatprep.subr.mxu0 0.0
    %1262 = vmatpush1.msra.mxu0 0.0
    %1263 = vmatprep.subr.mxu0 0.0
    %1264 = vmatpush1.msra.mxu0 0.0
    %1265 = vmatprep.subr.mxu0 0.0
    %1266 = vmatpush1.msra.mxu0 0.0
    %1267 = vmatprep.subr.mxu0 0.0
    %1268 = vmatpush1.msra.mxu0 0.0
    %1269 = vmatprep.subr.mxu0 0.0
    %1270 = vmatpush1.msra.mxu0 0.0
    %1271 = vmatprep.subr.mxu0 0.0
    %1272 = vmatpush1.msra.mxu0 0.0
    %1273 = vmatprep.subr.mxu0 0.0
    %1274 = vmatpush1.msra.mxu0 0.0
    %1275 = vmatprep.subr.mxu0 0.0
    %1276 = vmatpush1.msra.mxu0 0.0
    %1277 = vmatprep.subr.mxu0 0.0
    %1278 = vmatpush1.msra.mxu0 0.0
    %1279 = vmatprep.subr.mxu0 0.0
    %1280 = vmatpush1.msra.mxu0 0.0
    %1281 = vmatprep.subr.mxu0 0.0
    %1282 = vmatpush1.msra.mxu0 0.0
    %1283 = vmatprep.subr.mxu0 0.0
    %1284 = vmatpush1.msra.mxu0 0.0
    %1285 = vmatprep.subr.mxu0 0.0
    %1286 = vmatpush1.msra.mxu0 0.0
    %1287 = vmatprep.subr.mxu0 0.0
    %1288 = vmatpush1.msra.mxu0 0.0
    %1289 = vmatprep.subr.mxu0 0.0
    %1290 = vmatpush1.msra.mxu0 0.0
    %1291 = vmatprep.subr.mxu0 0.0
    %1292 = vmatpush1.msra.mxu0 0.0
    %1293 = vmatprep.subr.mxu0 0.0
    %1294 = vmatpush1.msra.mxu0 0.0
    %1295 = vmatprep.subr.mxu0 0.0
    %1296 = vmatpush1.msra.mxu0 0.0
    %1297 = vmatprep.mubr.f32.mxu0 0.0
    %1298 = vmatmul.mubr.f32.gmra.mrb[0].mxu0 %v1186
    %v1299 = vpop.f32.mrb[0].mxu0
    %v1300 = vadd.f32 0.0, %v1299
    %v1301 = vpop.f32.mrb[0].mxu0
    %1302 = vmatprep.mubr.f32.mxu0 0.0
    %1303 = vmatmul.mubr.f32.gmra.mrb[0].mxu0 %v1189
    %v1304 = vpop.f32.mrb[0].mxu0
    %v1305 = vadd.f32 0.0, %v1304
    %v1306 = vpop.f32.mrb[0].mxu0
    %1307 = vmatprep.mubr.f32.mxu0 0.0
    %1308 = vmatmul.mubr.f32.gmra.mrb[0].mxu0 %v1192
    %v1309 = vpop.f32.mrb[0].mxu0
    %v1310 = vadd.f32 0.0, %v1309
    %v1311 = vpop.f32.mrb[0].mxu0
    %1312 = vmatprep.mubr.f32.mxu0 0.0
    %1313 = vmatmul.mubr.f32.gmra.mrb[0].mxu0 %v1195
    %v1314 = vpop.f32.mrb[0].mxu0
    %v1315 = vadd.f32 0.0, %v1314
    %v1316 = vpop.f32.mrb[0].mxu0
    %1317 = vmatprep.mubr.f32.mxu0 0.0
    %1318 = vmatmul.mubr.f32.gmra.mrb[0].mxu0 %v1198
    %v1319 = vpop.f32.mrb[0].mxu0
    %v1320 = vadd.f32 0.0, %v1319
    %v1321 = vpop.f32.mrb[0].mxu0
    %1322 = vmatprep.mubr.f32.mxu0 0.0
    %1323 = vmatmul.mubr.f32.gmra.mrb[0].mxu0 %v1201
    %v1324 = vpop.f32.mrb[0].mxu0
    %v1325 = vadd.f32 0.0, %v1324
    %v1326 = vpop.f32.mrb[0].mxu0
    %1327 = vmatprep.mubr.f32.mxu0 0.0
    %1328 = vmatmul.mubr.f32.gmra.mrb[0].mxu0 %v1204
    %v1329 = vpop.f32.mrb[0].mxu0
    %v1330 = vadd.f32 0.0, %v1329
    %v1331 = vpop.f32.mrb[0].mxu0
    %1332 = vmatprep.mubr.f32.mxu0 0.0
    %1333 = vmatmul.mubr.f32.gmra.mrb[0].mxu0 %v1207
    %v1334 = vpop.f32.mrb[0].mxu0
    %v1335 = vadd.f32 0.0, %v1334
    %v1336 = vpop.f32.mrb[0].mxu0
    %1337 = vmatprep.mubr.f32.mxu0 0.0
    %1338 = vmatmul.mubr.f32.gmra.mrb[0].mxu0 %v1210
    %v1339 = vpop.f32.mrb[0].mxu0
    %v1340 = vadd.f32 0.0, %v1339
    %v1341 = vpop.f32.mrb[0].mxu0
    %1342 = vmatprep.mubr.f32.mxu0 0.0
    %1343 = vmatmul.mubr.f32.gmra.mrb[0].mxu0 %v1213
    %v1344 = vpop.f32.mrb[0].mxu0
    %v1345 = vadd.f32 0.0, %v1344
    %v1346 = vpop.f32.mrb[0].mxu0
    %1347 = vmatprep.mubr.f32.mxu0 0.0
    %1348 = vmatmul.mubr.f32.gmra.mrb[0].mxu0 %v1216
    %v1349 = vpop.f32.mrb[0].mxu0
    %v1350 = vadd.f32 0.0, %v1349
    %v1351 = vpop.f32.mrb[0].mxu0
    %1352 = vmatprep.mubr.f32.mxu0 0.0
    %1353 = vmatmul.mubr.f32.gmra.mrb[0].mxu0 %v1219
    %v1354 = vpop.f32.mrb[0].mxu0
    %v1355 = vadd.f32 0.0, %v1354
    %v1356 = vpop.f32.mrb[0].mxu0
    %1357 = vmatprep.mubr.f32.mxu0 0.0
    %1358 = vmatmul.mubr.f32.gmra.mrb[0].mxu0 %v1222
    %v1359 = vpop.f32.mrb[0].mxu0
    %v1360 = vadd.f32 0.0, %v1359
    %v1361 = vpop.f32.mrb[0].mxu0
    %1362 = vmatprep.mubr.f32.mxu0 0.0
    %1363 = vmatmul.mubr.f32.gmra.mrb[0].mxu0 %v1225
    %v1364 = vpop.f32.mrb[0].mxu0
    %v1365 = vadd.f32 0.0, %v1364
    %v1366 = vpop.f32.mrb[0].mxu0
    %1367 = vmatprep.mubr.f32.mxu0 0.0
    %1368 = vmatmul.mubr.f32.gmra.mrb[0].mxu0 %v1228
    %v1369 = vpop.f32.mrb[0].mxu0
    %v1370 = vadd.f32 0.0, %v1369
    %v1371 = vpop.f32.mrb[0].mxu0
    %1372 = vmatprep.mubr.f32.mxu0 0.0
    %1373 = vmatmul.mubr.f32.gmra.mrb[0].mxu0 %v1231
    %v1374 = vpop.f32.mrb[0].mxu0
    %v1375 = vadd.f32 0.0, %v1374
    %v1376 = vpop.f32.mrb[0].mxu0
    %1377 = vdwg.mxu0
    %1378 = vxpose.xlu0.b32.start [1/16] %v1144, 128
    %1379 = vxpose.xlu0.b32.cont [2/16] %v1145, 128
    %1380 = vxpose.xlu0.b32.cont [3/16] %v1146, 128
    %1381 = vxpose.xlu0.b32.cont [4/16] %v1147, 128
    %1382 = vxpose.xlu0.b32.cont [5/16] %v1148, 128
    %1383 = vxpose.xlu0.b32.cont [6/16] %v1149, 128
    %1384 = vxpose.xlu0.b32.cont [7/16] %v1150, 128
    %1385 = vxpose.xlu0.b32.cont [8/16] %v1151, 128
    %1386 = vxpose.xlu0.b32.cont [9/16] 0.0, 128
    %1387 = vxpose.xlu0.b32.cont [10/16] 0.0, 128
    %1388 = vxpose.xlu0.b32.cont [11/16] 0.0, 128
    %1389 = vxpose.xlu0.b32.cont [12/16] 0.0, 128
    %1390 = vxpose.xlu0.b32.cont [13/16] 0.0, 128
    %1391 = vxpose.xlu0.b32.cont [14/16] 0.0, 128
    %1392 = vxpose.xlu0.b32.cont [15/16] 0.0, 128
    %1393 = vxpose.xlu0.b32.end [16/16] 0.0, 128
    %v1394 = vpop.trf.xlu0
    %v1395 = vpop.trf.xlu0
    %v1396 = vpop.trf.xlu0
    %v1397 = vpop.trf.xlu0
    %v1398 = vpop.trf.xlu0
    %v1399 = vpop.trf.xlu0
    %v1400 = vpop.trf.xlu0
    %v1401 = vpop.trf.xlu0
    %v1402 = vpop.trf.xlu0
    %v1403 = vpop.trf.xlu0
    %v1404 = vpop.trf.xlu0
    %v1405 = vpop.trf.xlu0
    %v1406 = vpop.trf.xlu0
    %v1407 = vpop.trf.xlu0
    %v1408 = vpop.trf.xlu0
    %v1409 = vpop.trf.xlu0
    %v1411 = vsel %vm1184, %v1394, 0
    %v1414 = vsel %vm1184, %v1395, 0
    %v1417 = vsel %vm1184, %v1396, 0
    %v1420 = vsel %vm1184, %v1397, 0
    %v1423 = vsel %vm1184, %v1398, 0
    %v1426 = vsel %vm1184, %v1399, 0
    %v1429 = vsel %vm1184, %v1400, 0
    %v1432 = vsel %vm1184, %v1401, 0
    %v1435 = vsel %vm1184, %v1402, 0
    %v1438 = vsel %vm1184, %v1403, 0
    %v1441 = vsel %vm1184, %v1404, 0
    %v1444 = vsel %vm1184, %v1405, 0
    %v1447 = vsel %vm1184, %v1406, 0
    %v1450 = vsel %vm1184, %v1407, 0
    %v1453 = vsel %vm1184, %v1408, 0
    %v1456 = vsel %vm1184, %v1409, 0
    %1458 = vmatprep.subr.mxu0 0.0
    %1459 = vmatpush1.msra.mxu0 %v411
    %1460 = vmatprep.subr.mxu0 0.0
    %1461 = vmatpush1.msra.mxu0 %v416
    %1462 = vmatprep.subr.mxu0 0.0
    %1463 = vmatpush1.msra.mxu0 %v421
    %1464 = vmatprep.subr.mxu0 0.0
    %1465 = vmatpush1.msra.mxu0 %v426
    %1466 = vmatprep.subr.mxu0 0.0
    %1467 = vmatpush1.msra.mxu0 %v431
    %1468 = vmatprep.subr.mxu0 0.0
    %1469 = vmatpush1.msra.mxu0 %v436
    %1470 = vmatprep.subr.mxu0 0.0
    %1471 = vmatpush1.msra.mxu0 %v441
    %1472 = vmatprep.subr.mxu0 0.0
    %1473 = vmatpush1.msra.mxu0 %v446
    %1474 = vmatprep.subr.mxu0 0.0
    %1475 = vmatpush1.msra.mxu0 0.0
    %1476 = vmatprep.subr.mxu0 0.0
    %1477 = vmatpush1.msra.mxu0 0.0
    %1478 = vmatprep.subr.mxu0 0.0
    %1479 = vmatpush1.msra.mxu0 0.0
    %1480 = vmatprep.subr.mxu0 0.0
    %1481 = vmatpush1.msra.mxu0 0.0
    %1482 = vmatprep.subr.mxu0 0.0
    %1483 = vmatpush1.msra.mxu0 0.0
    %1484 = vmatprep.subr.mxu0 0.0
    %1485 = vmatpush1.msra.mxu0 0.0
    %1486 = vmatprep.subr.mxu0 0.0
    %1487 = vmatpush1.msra.mxu0 0.0
    %1488 = vmatprep.subr.mxu0 0.0
    %1489 = vmatpush1.msra.mxu0 0.0
    %1490 = vmatprep.subr.mxu0 0.0
    %1491 = vmatpush1.msra.mxu0 0.0
    %1492 = vmatprep.subr.mxu0 0.0
    %1493 = vmatpush1.msra.mxu0 0.0
    %1494 = vmatprep.subr.mxu0 0.0
    %1495 = vmatpush1.msra.mxu0 0.0
    %1496 = vmatprep.subr.mxu0 0.0
    %1497 = vmatpush1.msra.mxu0 0.0
    %1498 = vmatprep.subr.mxu0 0.0
    %1499 = vmatpush1.msra.mxu0 0.0
    %1500 = vmatprep.subr.mxu0 0.0
    %1501 = vmatpush1.msra.mxu0 0.0
    %1502 = vmatprep.subr.mxu0 0.0
    %1503 = vmatpush1.msra.mxu0 0.0
    %1504 = vmatprep.subr.mxu0 0.0
    %1505 = vmatpush1.msra.mxu0 0.0
    %1506 = vmatprep.subr.mxu0 0.0
    %1507 = vmatpush1.msra.mxu0 0.0
    %1508 = vmatprep.subr.mxu0 0.0
    %1509 = vmatpush1.msra.mxu0 0.0
    %1510 = vmatprep.subr.mxu0 0.0
    %1511 = vmatpush1.msra.mxu0 0.0
    %1512 = vmatprep.subr.mxu0 0.0
    %1513 = vmatpush1.msra.mxu0 0.0
    %1514 = vmatprep.subr.mxu0 0.0
    %1515 = vmatpush1.msra.mxu0 0.0
    %1516 = vmatprep.subr.mxu0 0.0
    %1517 = vmatpush1.msra.mxu0 0.0
    %1518 = vmatprep.subr.mxu0 0.0
    %1519 = vmatpush1.msra.mxu0 0.0
    %1520 = vmatprep.subr.mxu0 0.0
    %1521 = vmatpush1.msra.mxu0 0.0
    %1522 = vmatprep.mubr.f32.mxu0 0.0
    %1523 = vmatmul.mubr.f32.gmra.mrb[0].mxu0 %v1411
    %v1524 = vpop.f32.mrb[0].mxu0
    %v1525 = vadd.f32 0.0, %v1524
    %v1526 = vpop.f32.mrb[0].mxu0
    %1527 = vmatprep.mubr.f32.mxu0 0.0
    %1528 = vmatmul.mubr.f32.gmra.mrb[0].mxu0 %v1414
    %v1529 = vpop.f32.mrb[0].mxu0
    %v1530 = vadd.f32 0.0, %v1529
    %v1531 = vpop.f32.mrb[0].mxu0
    %1532 = vmatprep.mubr.f32.mxu0 0.0
    %1533 = vmatmul.mubr.f32.gmra.mrb[0].mxu0 %v1417
    %v1534 = vpop.f32.mrb[0].mxu0
    %v1535 = vadd.f32 0.0, %v1534
    %v1536 = vpop.f32.mrb[0].mxu0
    %1537 = vmatprep.mubr.f32.mxu0 0.0
    %1538 = vmatmul.mubr.f32.gmra.mrb[0].mxu0 %v1420
    %v1539 = vpop.f32.mrb[0].mxu0
    %v1540 = vadd.f32 0.0, %v1539
    %v1541 = vpop.f32.mrb[0].mxu0
    %1542 = vmatprep.mubr.f32.mxu0 0.0
    %1543 = vmatmul.mubr.f32.gmra.mrb[0].mxu0 %v1423
    %v1544 = vpop.f32.mrb[0].mxu0
    %v1545 = vadd.f32 0.0, %v1544
    %v1546 = vpop.f32.mrb[0].mxu0
    %1547 = vmatprep.mubr.f32.mxu0 0.0
    %1548 = vmatmul.mubr.f32.gmra.mrb[0].mxu0 %v1426
    %v1549 = vpop.f32.mrb[0].mxu0
    %v1550 = vadd.f32 0.0, %v1549
    %v1551 = vpop.f32.mrb[0].mxu0
    %1552 = vmatprep.mubr.f32.mxu0 0.0
    %1553 = vmatmul.mubr.f32.gmra.mrb[0].mxu0 %v1429
    %v1554 = vpop.f32.mrb[0].mxu0
    %v1555 = vadd.f32 0.0, %v1554
    %v1556 = vpop.f32.mrb[0].mxu0
    %1557 = vmatprep.mubr.f32.mxu0 0.0
    %1558 = vmatmul.mubr.f32.gmra.mrb[0].mxu0 %v1432
    %v1559 = vpop.f32.mrb[0].mxu0
    %v1560 = vadd.f32 0.0, %v1559
    %v1561 = vpop.f32.mrb[0].mxu0
    %1562 = vmatprep.mubr.f32.mxu0 0.0
    %1563 = vmatmul.mubr.f32.gmra.mrb[0].mxu0 %v1435
    %v1564 = vpop.f32.mrb[0].mxu0
    %v1565 = vadd.f32 0.0, %v1564
    %v1566 = vpop.f32.mrb[0].mxu0
    %1567 = vmatprep.mubr.f32.mxu0 0.0
    %1568 = vmatmul.mubr.f32.gmra.mrb[0].mxu0 %v1438
    %v1569 = vpop.f32.mrb[0].mxu0
    %v1570 = vadd.f32 0.0, %v1569
    %v1571 = vpop.f32.mrb[0].mxu0
    %1572 = vmatprep.mubr.f32.mxu0 0.0
    %1573 = vmatmul.mubr.f32.gmra.mrb[0].mxu0 %v1441
    %v1574 = vpop.f32.mrb[0].mxu0
    %v1575 = vadd.f32 0.0, %v1574
    %v1576 = vpop.f32.mrb[0].mxu0
    %1577 = vmatprep.mubr.f32.mxu0 0.0
    %1578 = vmatmul.mubr.f32.gmra.mrb[0].mxu0 %v1444
    %v1579 = vpop.f32.mrb[0].mxu0
    %v1580 = vadd.f32 0.0, %v1579
    %v1581 = vpop.f32.mrb[0].mxu0
    %1582 = vmatprep.mubr.f32.mxu0 0.0
    %1583 = vmatmul.mubr.f32.gmra.mrb[0].mxu0 %v1447
    %v1584 = vpop.f32.mrb[0].mxu0
    %v1585 = vadd.f32 0.0, %v1584
    %v1586 = vpop.f32.mrb[0].mxu0
    %1587 = vmatprep.mubr.f32.mxu0 0.0
    %1588 = vmatmul.mubr.f32.gmra.mrb[0].mxu0 %v1450
    %v1589 = vpop.f32.mrb[0].mxu0
    %v1590 = vadd.f32 0.0, %v1589
    %v1591 = vpop.f32.mrb[0].mxu0
    %1592 = vmatprep.mubr.f32.mxu0 0.0
    %1593 = vmatmul.mubr.f32.gmra.mrb[0].mxu0 %v1453
    %v1594 = vpop.f32.mrb[0].mxu0
    %v1595 = vadd.f32 0.0, %v1594
    %v1596 = vpop.f32.mrb[0].mxu0
    %1597 = vmatprep.mubr.f32.mxu0 0.0
    %1598 = vmatmul.mubr.f32.gmra.mrb[0].mxu0 %v1456
    %v1599 = vpop.f32.mrb[0].mxu0
    %v1600 = vadd.f32 0.0, %v1599
    %v1601 = vpop.f32.mrb[0].mxu0
    %1602 = vdwg.mxu0
    %v1603 = vmul.f32 %v1300, %v449
    %v1604 = vmul.f32 %v1305, %v450
    %v1605 = vmul.f32 %v1310, %v451
    %v1606 = vmul.f32 %v1315, %v452
    %v1607 = vmul.f32 %v1320, %v453
    %v1608 = vmul.f32 %v1325, %v454
    %v1609 = vmul.f32 %v1330, %v455
    %v1610 = vmul.f32 %v1335, %v456
    %v1611 = vmul.f32 %v1340, %v457
    %v1612 = vmul.f32 %v1345, %v458
    %v1613 = vmul.f32 %v1350, %v459
    %v1614 = vmul.f32 %v1355, %v460
    %v1615 = vmul.f32 %v1360, %v461
    %v1616 = vmul.f32 %v1365, %v462
    %v1617 = vmul.f32 %v1370, %v463
    %v1618 = vmul.f32 %v1375, %v464
    %v1619 = vmul.f32 %v1525, %v449
    %v1620 = vmul.f32 %v1530, %v450
    %v1621 = vmul.f32 %v1535, %v451
    %v1622 = vmul.f32 %v1540, %v452
    %v1623 = vmul.f32 %v1545, %v453
    %v1624 = vmul.f32 %v1550, %v454
    %v1625 = vmul.f32 %v1555, %v455
    %v1626 = vmul.f32 %v1560, %v456
    %v1627 = vmul.f32 %v1565, %v457
    %v1628 = vmul.f32 %v1570, %v458
    %v1629 = vmul.f32 %v1575, %v459
    %v1630 = vmul.f32 %v1580, %v460
    %v1631 = vmul.f32 %v1585, %v461
    %v1632 = vmul.f32 %v1590, %v462
    %v1633 = vmul.f32 %v1595, %v463
    %v1634 = vmul.f32 %v1600, %v464
    %1635 = vmatprep.subr.mxu0 0.0
    %1636 = vmatpush1.msra.mxu0 %v1603
    %1637 = vmatprep.subr.mxu0 0.0
    %1638 = vmatpush1.msra.mxu0 %v1604
    %1639 = vmatprep.subr.mxu0 0.0
    %1640 = vmatpush1.msra.mxu0 %v1605
    %1641 = vmatprep.subr.mxu0 0.0
    %1642 = vmatpush1.msra.mxu0 %v1606
    %1643 = vmatprep.subr.mxu0 0.0
    %1644 = vmatpush1.msra.mxu0 %v1607
    %1645 = vmatprep.subr.mxu0 0.0
    %1646 = vmatpush1.msra.mxu0 %v1608
    %1647 = vmatprep.subr.mxu0 0.0
    %1648 = vmatpush1.msra.mxu0 %v1609
    %1649 = vmatprep.subr.mxu0 0.0
    %1650 = vmatpush1.msra.mxu0 %v1610
    %1651 = vmatprep.subr.mxu0 0.0
    %1652 = vmatpush1.msra.mxu0 %v1611
    %1653 = vmatprep.subr.mxu0 0.0
    %1654 = vmatpush1.msra.mxu0 %v1612
    %1655 = vmatprep.subr.mxu0 0.0
    %1656 = vmatpush1.msra.mxu0 %v1613
    %1657 = vmatprep.subr.mxu0 0.0
    %1658 = vmatpush1.msra.mxu0 %v1614
    %1659 = vmatprep.subr.mxu0 0.0
    %1660 = vmatpush1.msra.mxu0 %v1615
    %1661 = vmatprep.subr.mxu0 0.0
    %1662 = vmatpush1.msra.mxu0 %v1616
    %1663 = vmatprep.subr.mxu0 0.0
    %1664 = vmatpush1.msra.mxu0 %v1617
    %1665 = vmatprep.subr.mxu0 0.0
    %1666 = vmatpush1.msra.mxu0 %v1618
    %1667 = vmatprep.subr.mxu0 0.0
    %1668 = vmatpush1.msra.mxu0 0.0
    %1669 = vmatprep.subr.mxu0 0.0
    %1670 = vmatpush1.msra.mxu0 0.0
    %1671 = vmatprep.subr.mxu0 0.0
    %1672 = vmatpush1.msra.mxu0 0.0
    %1673 = vmatprep.subr.mxu0 0.0
    %1674 = vmatpush1.msra.mxu0 0.0
    %1675 = vmatprep.subr.mxu0 0.0
    %1676 = vmatpush1.msra.mxu0 0.0
    %1677 = vmatprep.subr.mxu0 0.0
    %1678 = vmatpush1.msra.mxu0 0.0
    %1679 = vmatprep.subr.mxu0 0.0
    %1680 = vmatpush1.msra.mxu0 0.0
    %1681 = vmatprep.subr.mxu0 0.0
    %1682 = vmatpush1.msra.mxu0 0.0
    %1683 = vmatprep.subr.mxu0 0.0
    %1684 = vmatpush1.msra.mxu0 0.0
    %1685 = vmatprep.subr.mxu0 0.0
    %1686 = vmatpush1.msra.mxu0 0.0
    %1687 = vmatprep.subr.mxu0 0.0
    %1688 = vmatpush1.msra.mxu0 0.0
    %1689 = vmatprep.subr.mxu0 0.0
    %1690 = vmatpush1.msra.mxu0 0.0
    %1691 = vmatprep.subr.mxu0 0.0
    %1692 = vmatpush1.msra.mxu0 0.0
    %1693 = vmatprep.subr.mxu0 0.0
    %1694 = vmatpush1.msra.mxu0 0.0
    %1695 = vmatprep.subr.mxu0 0.0
    %1696 = vmatpush1.msra.mxu0 0.0
    %1697 = vmatprep.subr.mxu0 0.0
    %1698 = vmatpush1.msra.mxu0 0.0
    %1699 = vmatprep.mubr.f32.mxu0 0.0
    %1700 = vmatmul.mubr.f32.gmra.mrb[0].mxu0 %v1018
    %v1701 = vpop.f32.mrb[0].mxu0
    %v1702 = vadd.f32 0.0, %v1701
    %v1703 = vpop.f32.mrb[0].mxu0
    %1704 = vmatprep.mubr.f32.mxu0 0.0
    %1705 = vmatmul.mubr.f32.gmra.mrb[0].mxu0 %v1019
    %v1706 = vpop.f32.mrb[0].mxu0
    %v1707 = vadd.f32 0.0, %v1706
    %v1708 = vpop.f32.mrb[0].mxu0
    %1709 = vmatprep.mubr.f32.mxu0 0.0
    %1710 = vmatmul.mubr.f32.gmra.mrb[0].mxu0 %v1020
    %v1711 = vpop.f32.mrb[0].mxu0
    %v1712 = vadd.f32 0.0, %v1711
    %v1713 = vpop.f32.mrb[0].mxu0
    %1714 = vmatprep.mubr.f32.mxu0 0.0
    %1715 = vmatmul.mubr.f32.gmra.mrb[0].mxu0 %v1021
    %v1716 = vpop.f32.mrb[0].mxu0
    %v1717 = vadd.f32 0.0, %v1716
    %v1718 = vpop.f32.mrb[0].mxu0
    %1719 = vmatprep.mubr.f32.mxu0 0.0
    %1720 = vmatmul.mubr.f32.gmra.mrb[0].mxu0 %v1022
    %v1721 = vpop.f32.mrb[0].mxu0
    %v1722 = vadd.f32 0.0, %v1721
    %v1723 = vpop.f32.mrb[0].mxu0
    %1724 = vmatprep.mubr.f32.mxu0 0.0
    %1725 = vmatmul.mubr.f32.gmra.mrb[0].mxu0 %v1023
    %v1726 = vpop.f32.mrb[0].mxu0
    %v1727 = vadd.f32 0.0, %v1726
    %v1728 = vpop.f32.mrb[0].mxu0
    %1729 = vmatprep.mubr.f32.mxu0 0.0
    %1730 = vmatmul.mubr.f32.gmra.mrb[0].mxu0 %v1024
    %v1731 = vpop.f32.mrb[0].mxu0
    %v1732 = vadd.f32 0.0, %v1731
    %v1733 = vpop.f32.mrb[0].mxu0
    %1734 = vmatprep.mubr.f32.mxu0 0.0
    %1735 = vmatmul.mubr.f32.gmra.mrb[0].mxu0 %v1025
    %v1736 = vpop.f32.mrb[0].mxu0
    %v1737 = vadd.f32 0.0, %v1736
    %v1738 = vpop.f32.mrb[0].mxu0
    %1739 = vdwg.mxu0
    %1740 = vmatprep.subr.mxu0 0.0
    %1741 = vmatpush1.msra.mxu0 %v1619
    %1742 = vmatprep.subr.mxu0 0.0
    %1743 = vmatpush1.msra.mxu0 %v1620
    %1744 = vmatprep.subr.mxu0 0.0
    %1745 = vmatpush1.msra.mxu0 %v1621
    %1746 = vmatprep.subr.mxu0 0.0
    %1747 = vmatpush1.msra.mxu0 %v1622
    %1748 = vmatprep.subr.mxu0 0.0
    %1749 = vmatpush1.msra.mxu0 %v1623
    %1750 = vmatprep.subr.mxu0 0.0
    %1751 = vmatpush1.msra.mxu0 %v1624
    %1752 = vmatprep.subr.mxu0 0.0
    %1753 = vmatpush1.msra.mxu0 %v1625
    %1754 = vmatprep.subr.mxu0 0.0
    %1755 = vmatpush1.msra.mxu0 %v1626
    %1756 = vmatprep.subr.mxu0 0.0
    %1757 = vmatpush1.msra.mxu0 %v1627
    %1758 = vmatprep.subr.mxu0 0.0
    %1759 = vmatpush1.msra.mxu0 %v1628
    %1760 = vmatprep.subr.mxu0 0.0
    %1761 = vmatpush1.msra.mxu0 %v1629
    %1762 = vmatprep.subr.mxu0 0.0
    %1763 = vmatpush1.msra.mxu0 %v1630
    %1764 = vmatprep.subr.mxu0 0.0
    %1765 = vmatpush1.msra.mxu0 %v1631
    %1766 = vmatprep.subr.mxu0 0.0
    %1767 = vmatpush1.msra.mxu0 %v1632
    %1768 = vmatprep.subr.mxu0 0.0
    %1769 = vmatpush1.msra.mxu0 %v1633
    %1770 = vmatprep.subr.mxu0 0.0
    %1771 = vmatpush1.msra.mxu0 %v1634
    %1772 = vmatprep.subr.mxu0 0.0
    %1773 = vmatpush1.msra.mxu0 0.0
    %1774 = vmatprep.subr.mxu0 0.0
    %1775 = vmatpush1.msra.mxu0 0.0
    %1776 = vmatprep.subr.mxu0 0.0
    %1777 = vmatpush1.msra.mxu0 0.0
    %1778 = vmatprep.subr.mxu0 0.0
    %1779 = vmatpush1.msra.mxu0 0.0
    %1780 = vmatprep.subr.mxu0 0.0
    %1781 = vmatpush1.msra.mxu0 0.0
    %1782 = vmatprep.subr.mxu0 0.0
    %1783 = vmatpush1.msra.mxu0 0.0
    %1784 = vmatprep.subr.mxu0 0.0
    %1785 = vmatpush1.msra.mxu0 0.0
    %1786 = vmatprep.subr.mxu0 0.0
    %1787 = vmatpush1.msra.mxu0 0.0
    %1788 = vmatprep.subr.mxu0 0.0
    %1789 = vmatpush1.msra.mxu0 0.0
    %1790 = vmatprep.subr.mxu0 0.0
    %1791 = vmatpush1.msra.mxu0 0.0
    %1792 = vmatprep.subr.mxu0 0.0
    %1793 = vmatpush1.msra.mxu0 0.0
    %1794 = vmatprep.subr.mxu0 0.0
    %1795 = vmatpush1.msra.mxu0 0.0
    %1796 = vmatprep.subr.mxu0 0.0
    %1797 = vmatpush1.msra.mxu0 0.0
    %1798 = vmatprep.subr.mxu0 0.0
    %1799 = vmatpush1.msra.mxu0 0.0
    %1800 = vmatprep.subr.mxu0 0.0
    %1801 = vmatpush1.msra.mxu0 0.0
    %1802 = vmatprep.subr.mxu0 0.0
    %1803 = vmatpush1.msra.mxu0 0.0
    %1804 = vmatprep.mubr.f32.mxu0 0.0
    %1805 = vmatmul.mubr.f32.gmra.mrb[0].mxu0 %v1026
    %v1806 = vpop.f32.mrb[0].mxu0
    %v1807 = vadd.f32 0.0, %v1806
    %v1808 = vpop.f32.mrb[0].mxu0
    %1809 = vmatprep.mubr.f32.mxu0 0.0
    %1810 = vmatmul.mubr.f32.gmra.mrb[0].mxu0 %v1027
    %v1811 = vpop.f32.mrb[0].mxu0
    %v1812 = vadd.f32 0.0, %v1811
    %v1813 = vpop.f32.mrb[0].mxu0
    %1814 = vmatprep.mubr.f32.mxu0 0.0
    %1815 = vmatmul.mubr.f32.gmra.mrb[0].mxu0 %v1028
    %v1816 = vpop.f32.mrb[0].mxu0
    %v1817 = vadd.f32 0.0, %v1816
    %v1818 = vpop.f32.mrb[0].mxu0
    %1819 = vmatprep.mubr.f32.mxu0 0.0
    %1820 = vmatmul.mubr.f32.gmra.mrb[0].mxu0 %v1029
    %v1821 = vpop.f32.mrb[0].mxu0
    %v1822 = vadd.f32 0.0, %v1821
    %v1823 = vpop.f32.mrb[0].mxu0
    %1824 = vmatprep.mubr.f32.mxu0 0.0
    %1825 = vmatmul.mubr.f32.gmra.mrb[0].mxu0 %v1030
    %v1826 = vpop.f32.mrb[0].mxu0
    %v1827 = vadd.f32 0.0, %v1826
    %v1828 = vpop.f32.mrb[0].mxu0
    %1829 = vmatprep.mubr.f32.mxu0 0.0
    %1830 = vmatmul.mubr.f32.gmra.mrb[0].mxu0 %v1031
    %v1831 = vpop.f32.mrb[0].mxu0
    %v1832 = vadd.f32 0.0, %v1831
    %v1833 = vpop.f32.mrb[0].mxu0
    %1834 = vmatprep.mubr.f32.mxu0 0.0
    %1835 = vmatmul.mubr.f32.gmra.mrb[0].mxu0 %v1032
    %v1836 = vpop.f32.mrb[0].mxu0
    %v1837 = vadd.f32 0.0, %v1836
    %v1838 = vpop.f32.mrb[0].mxu0
    %1839 = vmatprep.mubr.f32.mxu0 0.0
    %1840 = vmatmul.mubr.f32.gmra.mrb[0].mxu0 %v1033
    %v1841 = vpop.f32.mrb[0].mxu0
    %v1842 = vadd.f32 0.0, %v1841
    %v1843 = vpop.f32.mrb[0].mxu0
    %1844 = vdwg.mxu0
    %v1845 = vld [vmem:[#allocation7] sm:$0xff]
    %v1846 = vld [vmem:[#allocation7 + $0x8] sm:$0xff]
    %v1847 = vld [vmem:[#allocation7 + $0x10] sm:$0xff]
    %v1848 = vld [vmem:[#allocation7 + $0x18] sm:$0xff]
    %v1849 = vld [vmem:[#allocation7 + $0x20] sm:$0xff]
    %v1850 = vld [vmem:[#allocation7 + $0x28] sm:$0xff]
    %v1851 = vld [vmem:[#allocation7 + $0x30] sm:$0xff]
    %v1852 = vld [vmem:[#allocation7 + $0x38] sm:$0xff]
    %v1853 = vld [vmem:[#allocation7 + $0x40] sm:$0xff]
    %v1854 = vld [vmem:[#allocation7 + $0x48] sm:$0xff]
    %v1855 = vld [vmem:[#allocation7 + $0x50] sm:$0xff]
    %v1856 = vld [vmem:[#allocation7 + $0x58] sm:$0xff]
    %v1857 = vld [vmem:[#allocation7 + $0x60] sm:$0xff]
    %v1858 = vld [vmem:[#allocation7 + $0x68] sm:$0xff]
    %v1859 = vld [vmem:[#allocation7 + $0x70] sm:$0xff]
    %v1860 = vld [vmem:[#allocation7 + $0x78] sm:$0xff]
    %v1861 = vld [vmem:[%s3] sm:$0x1]
    %v1863 = vlaneseq
    %v1864 = vshrl.u32 %v1863, 7
    %v1865 = vsub.s32 0, %v1864
    %v1866 = vrot.slane %v1861, %v1865
    %1868 = vmatprep.subr.mxu0 0.0
    %1869 = vmatpush1.msra.mxu0 %v1845
    %1870 = vmatprep.subr.mxu0 0.0
    %1871 = vmatpush1.msra.mxu0 %v1846
    %1872 = vmatprep.subr.mxu0 0.0
    %1873 = vmatpush1.msra.mxu0 %v1847
    %1874 = vmatprep.subr.mxu0 0.0
    %1875 = vmatpush1.msra.mxu0 %v1848
    %1876 = vmatprep.subr.mxu0 0.0
    %1877 = vmatpush1.msra.mxu0 %v1849
    %1878 = vmatprep.subr.mxu0 0.0
    %1879 = vmatpush1.msra.mxu0 %v1850
    %1880 = vmatprep.subr.mxu0 0.0
    %1881 = vmatpush1.msra.mxu0 %v1851
    %1882 = vmatprep.subr.mxu0 0.0
    %1883 = vmatpush1.msra.mxu0 %v1852
    %1884 = vmatprep.subr.mxu0 0.0
    %1885 = vmatpush1.msra.mxu0 %v1853
    %1886 = vmatprep.subr.mxu0 0.0
    %1887 = vmatpush1.msra.mxu0 %v1854
    %1888 = vmatprep.subr.mxu0 0.0
    %1889 = vmatpush1.msra.mxu0 %v1855
    %1890 = vmatprep.subr.mxu0 0.0
    %1891 = vmatpush1.msra.mxu0 %v1856
    %1892 = vmatprep.subr.mxu0 0.0
    %1893 = vmatpush1.msra.mxu0 %v1857
    %1894 = vmatprep.subr.mxu0 0.0
    %1895 = vmatpush1.msra.mxu0 %v1858
    %1896 = vmatprep.subr.mxu0 0.0
    %1897 = vmatpush1.msra.mxu0 %v1859
    %1898 = vmatprep.subr.mxu0 0.0
    %1899 = vmatpush1.msra.mxu0 %v1860
    %1900 = vmatprep.subr.mxu0 0.0
    %1901 = vmatpush1.msra.mxu0 0.0
    %1902 = vmatprep.subr.mxu0 0.0
    %1903 = vmatpush1.msra.mxu0 0.0
    %1904 = vmatprep.subr.mxu0 0.0
    %1905 = vmatpush1.msra.mxu0 0.0
    %1906 = vmatprep.subr.mxu0 0.0
    %1907 = vmatpush1.msra.mxu0 0.0
    %1908 = vmatprep.subr.mxu0 0.0
    %1909 = vmatpush1.msra.mxu0 0.0
    %1910 = vmatprep.subr.mxu0 0.0
    %1911 = vmatpush1.msra.mxu0 0.0
    %1912 = vmatprep.subr.mxu0 0.0
    %1913 = vmatpush1.msra.mxu0 0.0
    %1914 = vmatprep.subr.mxu0 0.0
    %1915 = vmatpush1.msra.mxu0 0.0
    %1916 = vmatprep.subr.mxu0 0.0
    %1917 = vmatpush1.msra.mxu0 0.0
    %1918 = vmatprep.subr.mxu0 0.0
    %1919 = vmatpush1.msra.mxu0 0.0
    %1920 = vmatprep.subr.mxu0 0.0
    %1921 = vmatpush1.msra.mxu0 0.0
    %1922 = vmatprep.subr.mxu0 0.0
    %1923 = vmatpush1.msra.mxu0 0.0
    %1924 = vmatprep.subr.mxu0 0.0
    %1925 = vmatpush1.msra.mxu0 0.0
    %1926 = vmatprep.subr.mxu0 0.0
    %1927 = vmatpush1.msra.mxu0 0.0
    %1928 = vmatprep.subr.mxu0 0.0
    %1929 = vmatpush1.msra.mxu0 0.0
    %1930 = vmatprep.subr.mxu0 0.0
    %1931 = vmatpush1.msra.mxu0 0.0
    %1932 = vmatprep.mubr.f32.mxu0 0.0
    %1933 = vmatmul.mubr.f32.gmra.mrb[0].mxu0 %v1702
    %v1934 = vpop.f32.mrb[0].mxu0
    %v1935 = vadd.f32 %v1866, %v1934
    %v1936 = vpop.f32.mrb[0].mxu0
    %1937 = vmatprep.mubr.f32.mxu0 0.0
    %1938 = vmatmul.mubr.f32.gmra.mrb[0].mxu0 %v1707
    %v1939 = vpop.f32.mrb[0].mxu0
    %v1940 = vadd.f32 %v1866, %v1939
    %v1941 = vpop.f32.mrb[0].mxu0
    %1942 = vmatprep.mubr.f32.mxu0 0.0
    %1943 = vmatmul.mubr.f32.gmra.mrb[0].mxu0 %v1712
    %v1944 = vpop.f32.mrb[0].mxu0
    %v1945 = vadd.f32 %v1866, %v1944
    %v1946 = vpop.f32.mrb[0].mxu0
    %1947 = vmatprep.mubr.f32.mxu0 0.0
    %1948 = vmatmul.mubr.f32.gmra.mrb[0].mxu0 %v1717
    %v1949 = vpop.f32.mrb[0].mxu0
    %v1950 = vadd.f32 %v1866, %v1949
    %v1951 = vpop.f32.mrb[0].mxu0
    %1952 = vmatprep.mubr.f32.mxu0 0.0
    %1953 = vmatmul.mubr.f32.gmra.mrb[0].mxu0 %v1722
    %v1954 = vpop.f32.mrb[0].mxu0
    %v1955 = vadd.f32 %v1866, %v1954
    %v1956 = vpop.f32.mrb[0].mxu0
    %1957 = vmatprep.mubr.f32.mxu0 0.0
    %1958 = vmatmul.mubr.f32.gmra.mrb[0].mxu0 %v1727
    %v1959 = vpop.f32.mrb[0].mxu0
    %v1960 = vadd.f32 %v1866, %v1959
    %v1961 = vpop.f32.mrb[0].mxu0
    %1962 = vmatprep.mubr.f32.mxu0 0.0
    %1963 = vmatmul.mubr.f32.gmra.mrb[0].mxu0 %v1732
    %v1964 = vpop.f32.mrb[0].mxu0
    %v1965 = vadd.f32 %v1866, %v1964
    %v1966 = vpop.f32.mrb[0].mxu0
    %1967 = vmatprep.mubr.f32.mxu0 0.0
    %1968 = vmatmul.mubr.f32.gmra.mrb[0].mxu0 %v1737
    %v1969 = vpop.f32.mrb[0].mxu0
    %v1970 = vadd.f32 %v1866, %v1969
    %v1971 = vpop.f32.mrb[0].mxu0
    %1972 = vmatprep.mubr.f32.mxu0 0.0
    %1973 = vmatmul.mubr.f32.gmra.mrb[0].mxu0 %v1807
    %v1974 = vpop.f32.mrb[0].mxu0
    %v1975 = vadd.f32 %v1866, %v1974
    %v1976 = vpop.f32.mrb[0].mxu0
    %1977 = vmatprep.mubr.f32.mxu0 0.0
    %1978 = vmatmul.mubr.f32.gmra.mrb[0].mxu0 %v1812
    %v1979 = vpop.f32.mrb[0].mxu0
    %v1980 = vadd.f32 %v1866, %v1979
    %v1981 = vpop.f32.mrb[0].mxu0
    %1982 = vmatprep.mubr.f32.mxu0 0.0
    %1983 = vmatmul.mubr.f32.gmra.mrb[0].mxu0 %v1817
    %v1984 = vpop.f32.mrb[0].mxu0
    %v1985 = vadd.f32 %v1866, %v1984
    %v1986 = vpop.f32.mrb[0].mxu0
    %1987 = vmatprep.mubr.f32.mxu0 0.0
    %1988 = vmatmul.mubr.f32.gmra.mrb[0].mxu0 %v1822
    %v1989 = vpop.f32.mrb[0].mxu0
    %v1990 = vadd.f32 %v1866, %v1989
    %v1991 = vpop.f32.mrb[0].mxu0
    %1992 = vmatprep.mubr.f32.mxu0 0.0
    %1993 = vmatmul.mubr.f32.gmra.mrb[0].mxu0 %v1827
    %v1994 = vpop.f32.mrb[0].mxu0
    %v1995 = vadd.f32 %v1866, %v1994
    %v1996 = vpop.f32.mrb[0].mxu0
    %1997 = vmatprep.mubr.f32.mxu0 0.0
    %1998 = vmatmul.mubr.f32.gmra.mrb[0].mxu0 %v1832
    %v1999 = vpop.f32.mrb[0].mxu0
    %v2000 = vadd.f32 %v1866, %v1999
    %v2001 = vpop.f32.mrb[0].mxu0
    %2002 = vmatprep.mubr.f32.mxu0 0.0
    %2003 = vmatmul.mubr.f32.gmra.mrb[0].mxu0 %v1837
    %v2004 = vpop.f32.mrb[0].mxu0
    %v2005 = vadd.f32 %v1866, %v2004
    %v2006 = vpop.f32.mrb[0].mxu0
    %2007 = vmatprep.mubr.f32.mxu0 0.0
    %2008 = vmatmul.mubr.f32.gmra.mrb[0].mxu0 %v1842
    %v2009 = vpop.f32.mrb[0].mxu0
    %v2010 = vadd.f32 %v1866, %v2009
    %v2011 = vpop.f32.mrb[0].mxu0
    %2012 = vdwg.mxu0
    %v2013 = vadd.f32 %v1935, %v79
    %v2014 = vadd.f32 %v1940, %v80
    %v2015 = vadd.f32 %v1945, %v81
    %v2016 = vadd.f32 %v1950, %v82
    %v2017 = vadd.f32 %v1955, %v83
    %v2018 = vadd.f32 %v1960, %v84
    %v2019 = vadd.f32 %v1965, %v85
    %v2020 = vadd.f32 %v1970, %v86
    %v2021 = vadd.f32 %v1975, %v87
    %v2022 = vadd.f32 %v1980, %v88
    %v2023 = vadd.f32 %v1985, %v89
    %v2024 = vadd.f32 %v1990, %v90
    %v2025 = vadd.f32 %v1995, %v91
    %v2026 = vadd.f32 %v2000, %v92
    %v2027 = vadd.f32 %v2005, %v93
    %v2028 = vadd.f32 %v2010, %v94
    %2029 = vst [vmem:[#allocation10] sm:$0xff] %v2013
    %2030 = vst [vmem:[#allocation10 + $0x8] sm:$0xff] %v2014
    %2031 = vst [vmem:[#allocation10 + $0x10] sm:$0xff] %v2015
    %2032 = vst [vmem:[#allocation10 + $0x18] sm:$0xff] %v2016
    %2033 = vst [vmem:[#allocation10 + $0x20] sm:$0xff] %v2017
    %2034 = vst [vmem:[#allocation10 + $0x28] sm:$0xff] %v2018
    %2035 = vst [vmem:[#allocation10 + $0x30] sm:$0xff] %v2019
    %2036 = vst [vmem:[#allocation10 + $0x38] sm:$0xff] %v2020
    %2037 = vst [vmem:[#allocation10 + $0x40] sm:$0xff] %v2021
    %2038 = vst [vmem:[#allocation10 + $0x48] sm:$0xff] %v2022
    %2039 = vst [vmem:[#allocation10 + $0x50] sm:$0xff] %v2023
    %2040 = vst [vmem:[#allocation10 + $0x58] sm:$0xff] %v2024
    %2041 = vst [vmem:[#allocation10 + $0x60] sm:$0xff] %v2025
    %2042 = vst [vmem:[#allocation10 + $0x68] sm:$0xff] %v2026
    %2043 = vst [vmem:[#allocation10 + $0x70] sm:$0xff] %v2027
    %2044 = vst [vmem:[#allocation10 + $0x78] sm:$0xff] %v2028
    // Predicated region
    $region42: #{tpu_custom_call.1} parent=1 // pred_check
      _
    $region43: #{tpu_custom_call.1} parent=1 // pred_check_branch
      %2046 = sbr.rel (0) target = $region45
    $region44: #{tpu_custom_call.1} parent=1 // pred_region
      %s2048 = ssub.s32 2048, 2048
      %2049 = vsyncadd [#allocation4], %s2048
      %s2050 = sshll.u32 [#allocation10], 4
      %s2051 = int_to_ptr.vmem [resolvable:$true] %s2050
      %2056 = dma.vmem_to_hbm [thread:$0]  %s2051, 2048, %s6, [#allocation4], 128, 128, 8
    $region45: #{tpu_custom_call.1} parent=1 // pred_fallthru
      _
    // Predicated region
    $region46: #{tpu_custom_call.1} parent=1 // pred_check
      _
    $region47: #{tpu_custom_call.1} parent=1 // pred_check_branch
      %2058 = sbr.rel (0) target = $region49
    $region48: #{tpu_custom_call.1} parent=1 // pred_region
      %2059 = dma.done [#allocation4], 2048
    $region49: #{tpu_custom_call.1} parent=1 // pred_fallthru
      _
    %2060 = vsyncpa [#allocation3], 1
    %2061 = vsyncpa [#allocation6], 1
    %2062 = vsyncpa [#allocation9], 1
    %2063 = vsyncpa [#allocation4], 1

</llo_original>
